<compile_context>
chip_gen: v6e
topology: v6e:2x2x1
jax: 0.10.0
libtpu: 0.0.40
codegen_flags: <defaults>
</compile_context>

<pallas_src>
import functools

import jax
import jax.numpy as jnp
from jax.experimental import pallas as pl
from jax.experimental.pallas import tpu as pltpu


def _unireplk_block_kernel(x_ref, mask_ref, wdw_ref, dwb_ref,
                           sewd_ref, sebd_ref, sewu_ref, sebu_ref,
                           w1_ref, b1_ref, gg_ref, gb_ref,
                           w2_ref, ob_ref,
                           o_ref, *, K, Wp, n_hw, grn_eps=1e-6):
    """One batch element, lane-dense (channels, H*Wp) compute slab.

    x_ref   : VMEM (C, Lext)   wrapper-pre-padded flat image (Wp-wide rows,
                               halo rows, +P guard zeros on both ends)
    mask_ref: VMEM (1, HWo)    1.0 on real pixels, 0.0 on the Wp halo columns
    wdw_ref : VMEM (C, K*K)    depthwise conv weights, BN1 scale folded (f32)
    dwb_ref : VMEM (C, 1)      BN1 bias (conv itself has no bias)
    se*_ref : SE 1x1-conv weights (bf16) / biases (f32)
    w1/b1   : pwconv1 dim->ffn weight (F, C) bf16, bias (F, 1) f32
    gg/gb   : GRN gamma / beta (F, 1) f32
    w2/ob   : pwconv2 ffn->dim weight (C, F) bf16 with BN2*layer-scale folded,
              bias (C, 1) f32 = layer-scale * BN2 bias
    o_ref   : VMEM (C, HWo)    output slab (x + residual); halo cols are junk
                               and are cropped by the wrapper.
    """
    C, HWo = o_ref.shape
    P = K // 2

    # ---- depthwise KxK conv: K*K static flat-shifted FMAs straight from the
    #      pre-padded input (no in-kernel scratch, no halo stores, no masks:
    #      every tap is a valid zero-padded read because rows are Wp wide).
    wdw = wdw_ref[...]                                      # (C, K*K), read once
    acc = jnp.zeros((C, HWo), jnp.float32)
    for dy in range(K):
        for dx in range(K):
            off = dy * Wp + dx                              # static offset
            w_col = wdw[:, dy * K + dx:dy * K + dx + 1]     # (C, 1) weight column
            acc = acc + w_col * x_ref[:, off:off + HWo]
    t = acc + dwb_ref[...]                                  # + folded BN1 bias

    # Zero the Wp halo columns once so the global reductions below (SE pool,
    # GRN L2) only see the n_hw real pixels.
    mask = mask_ref[...]                                    # (1, HWo)
    t = t * mask

    # ---- SE block: global avg pool -> 1x1 down -> ReLU -> 1x1 up -> sigmoid --
    s = (jnp.sum(t, axis=1, keepdims=True) * (1.0 / n_hw)).astype(jnp.bfloat16)
    d = jnp.dot(sewd_ref[...], s, preferred_element_type=jnp.float32) + sebd_ref[...]
    d = jnp.maximum(d, 0.0).astype(jnp.bfloat16)
    z = jnp.dot(sewu_ref[...], d, preferred_element_type=jnp.float32) + sebu_ref[...]
    u = pl.reciprocal(1.0 + jnp.exp(-z), approx=True)       # sigmoid, (C, 1)
    t = t * u                                               # (C, HWo)

    # ---- pwconv1 (Linear dim -> ffn): bf16 MXU operands, f32 accumulation ----
    h = jnp.dot(w1_ref[...], t.astype(jnp.bfloat16),
                preferred_element_type=jnp.float32) + b1_ref[...]       # (F, HWo)

    # ---- GELU (tanh approximation; transcendental rides the idle EUP slot) ---
    g = 0.5 * h * (1.0 + jnp.tanh(0.7978845608028654 * (h + 0.044715 * h * h * h)))
    g = g * mask      # halo cols carry GELU(bias); zero them for exact GRN stats

    # ---- GRN (global response norm over spatial, NHWC semantics), f32 --------
    gx = jnp.sqrt(jnp.sum(g * g, axis=1, keepdims=True))    # (F, 1) per-channel L2
    inv = pl.reciprocal(jnp.mean(gx, axis=0, keepdims=True) + grn_eps, approx=True)
    nx = gx * inv
    g = (gg_ref[...] * nx + 1.0) * g + gb_ref[...]

    # ---- pwconv2 (ffn -> dim, BN2 + layer-scale folded): bf16 MXU, f32 acc ---
    y = jnp.dot(w2_ref[...], g.astype(jnp.bfloat16),
                preferred_element_type=jnp.float32) + ob_ref[...]       # (C, HWo)

    # ---- residual: re-read x (== centre dwconv tap slice) only at the store --
    xc = x_ref[:, P * Wp + P:P * Wp + P + HWo]
    o_ref[...] = (xc + y).astype(o_ref.dtype)


def unireplknet_block(x, p, *, kernel_size):
    """x: (N, C, H, W) f32 -> (N, C, H, W); inference forward of UniRepLKNetBlock."""
    assert kernel_size in (3, 5), "fused kernel covers the plain depthwise branch"
    N, C, H, W = x.shape
    K = kernel_size
    P = K // 2
    Wp = W + 2 * P                 # padded row width: every conv tap reads in-bounds
    Hp = H + 2 * P
    HWo = H * Wp                   # compute-slab spatial size (includes halo columns)
    Lext = Hp * Wp + 2 * P         # flat padded length (+P guard zeros on each end)
    F = p["pw1_w"].shape[0]
    f32, bf16 = jnp.float32, jnp.bfloat16

    # --- fold BatchNorm (eval) + layer-scale into adjacent linear ops (exact) ---
    bn1_s = p["bn1_w"] / jnp.sqrt(p["bn1_rv"] + p["bn1_eps"])
    bn1_b = p["bn1_b"] - p["bn1_rm"] * bn1_s
    w_dw = (p["dw_w"].reshape(C, K * K) * bn1_s[:, None]).astype(f32)  # VPU -> keep f32
    dw_b = bn1_b.reshape(C, 1).astype(f32)

    bn2_s = p["bn2_w"] / jnp.sqrt(p["bn2_rv"] + p["bn2_eps"])
    bn2_b = p["bn2_b"] - p["bn2_rm"] * bn2_s
    out_s = p["gamma_ls"] * bn2_s
    w_pw2 = (p["pw2_w"] * out_s[:, None]).astype(bf16)                 # MXU -> bf16
    out_b = (p["gamma_ls"] * bn2_b).reshape(C, 1).astype(f32)

    se_wd = p["se_wd"].astype(bf16)
    se_bd = p["se_bd"].reshape(C, 1).astype(f32)
    se_wu = p["se_wu"].astype(bf16)
    se_bu = p["se_bu"].reshape(C, 1).astype(f32)
    w_pw1 = p["pw1_w"].astype(bf16)
    b_pw1 = p["pw1_b"].reshape(F, 1).astype(f32)
    grn_g = p["grn_g"].reshape(F, 1).astype(f32)
    grn_b = p["grn_b"].reshape(F, 1).astype(f32)

    # --- wrapper-side zero padding (layout plumbing outside the kernel) ---------
    #   (N,C,H,W) -> zero-pad to (N,C,Hp,Wp) -> flatten -> +P guard zeros each end
    x_pad = jnp.pad(x.astype(f32), ((0, 0), (0, 0), (P, P), (P, P)))
    x_ext = jnp.pad(x_pad.reshape(N, C, Hp * Wp), ((0, 0), (0, 0), (P, P)))

    # interior-column mask: 1 where the Wp-wide row position is a real pixel
    jcol = jnp.arange(HWo, dtype=jnp.int32) % Wp
    mask = ((jcol >= P) & (jcol < P + W)).astype(f32).reshape(1, HWo)

    const = lambda n: (0, 0)
    kernel = functools.partial(_unireplk_block_kernel, K=K, Wp=Wp, n_hw=H * W)
    out_f = pl.pallas_call(
        kernel,
        out_shape=jax.ShapeDtypeStruct((N, C, HWo), x.dtype),
        grid=(N,),
        in_specs=[
            pl.BlockSpec((None, C, Lext), lambda n: (n, 0, 0)),  # padded image
            pl.BlockSpec((1, HWo), const),                        # interior mask
            pl.BlockSpec((C, K * K), const),                      # dw weights (BN1 folded)
            pl.BlockSpec((C, 1), const),                          # BN1 bias
            pl.BlockSpec((C, C), const),                          # SE down weight (bf16)
            pl.BlockSpec((C, 1), const),                          # SE down bias
            pl.BlockSpec((C, C), const),                          # SE up weight (bf16)
            pl.BlockSpec((C, 1), const),                          # SE up bias
            pl.BlockSpec((F, C), const),                          # pwconv1 weight (bf16)
            pl.BlockSpec((F, 1), const),                          # pwconv1 bias
            pl.BlockSpec((F, 1), const),                          # GRN gamma
            pl.BlockSpec((F, 1), const),                          # GRN beta
            pl.BlockSpec((C, F), const),                          # pwconv2 weight (folded, bf16)
            pl.BlockSpec((C, 1), const),                          # output bias (folded)
        ],
        out_specs=pl.BlockSpec((None, C, HWo), lambda n: (n, 0, 0)),
        compiler_params=pltpu.CompilerParams(
            dimension_semantics=("parallel",)),   # batch images split across TCs
    )(x_ext, mask, w_dw, dw_b, se_wd, se_bd, se_wu, se_bu,
      w_pw1, b_pw1, grn_g, grn_b, w_pw2, out_b)

    # crop the Wp halo columns back off (outside the kernel, cheap)
    return out_f.reshape(N, C, H, Wp)[:, :, :, P:P + W]


def _reference_forward(x, p, kernel_size):
    """Pure-JAX reference mirroring the PyTorch eval-mode forward (exact GELU)."""
    N, C, H, W = x.shape
    K = kernel_size
    P = K // 2
    # depthwise conv (groups = C, bias=False)
    y = jax.lax.conv_general_dilated(
        x, p["dw_w"], window_strides=(1, 1), padding=((P, P), (P, P)),
        dimension_numbers=("NCHW", "OIHW", "NCHW"),
        feature_group_count=C, precision=jax.lax.Precision.HIGHEST)
    # BatchNorm2d (eval, running stats)
    s1 = p["bn1_w"] / jnp.sqrt(p["bn1_rv"] + p["bn1_eps"])
    b1 = p["bn1_b"] - p["bn1_rm"] * s1
    y = y * s1[None, :, None, None] + b1[None, :, None, None]
    # SEBlock
    s = jnp.mean(y, axis=(2, 3))                              # (N, C)
    d = jnp.maximum(s @ p["se_wd"].T + p["se_bd"], 0.0)
    u = jax.nn.sigmoid(d @ p["se_wu"].T + p["se_bu"])
    y = y * u[:, :, None, None]
    # pwconv1 (NHWC Linear) -> GELU -> GRN
    t = jnp.transpose(y, (0, 2, 3, 1))
    h = t @ p["pw1_w"].T + p["pw1_b"]
    h = jax.nn.gelu(h, approximate=False)
    gx = jnp.sqrt(jnp.sum(h * h, axis=(1, 2), keepdims=True))
    nx = gx / (jnp.mean(gx, axis=-1, keepdims=True) + 1e-6)
    h = (p["grn_g"].reshape(1, 1, 1, -1) * nx + 1.0) * h + p["grn_b"].reshape(1, 1, 1, -1)
    # pwconv2 (no bias) -> NCHW -> BatchNorm2d (eval)
    y2 = h @ p["pw2_w"].T
    y2 = jnp.transpose(y2, (0, 3, 1, 2))
    s2 = p["bn2_w"] / jnp.sqrt(p["bn2_rv"] + p["bn2_eps"])
    b2 = p["bn2_b"] - p["bn2_rm"] * s2
    y2 = y2 * s2[None, :, None, None] + b2[None, :, None, None]
    # layer scale + residual (drop_path = Identity)
    y2 = p["gamma_ls"][None, :, None, None] * y2
    return x + y2


if __name__ == "__main__":
    N, C, H, W = 2, 4, 16, 16
    K = 5                       # kernel_size in {3, 5}: plain depthwise-conv branch
    FFN = 4 * C                 # ffn_factor = 4

    root = jax.random.PRNGKey(0)
    ks = jax.random.split(root, 20)

    def nrm(k, shape, scale=1.0):
        return scale * jax.random.normal(k, shape, dtype=jnp.float32)

    params = {
        "dw_w":    nrm(ks[0], (C, 1, K, K), (2.0 / (K * K)) ** 0.5),
        "bn1_w":   1.0 + 0.1 * nrm(ks[1], (C,)),
        "bn1_b":   0.1 * nrm(ks[2], (C,)),
        "bn1_rm":  0.1 * nrm(ks[3], (C,)),
        "bn1_rv":  jax.random.uniform(ks[4], (C,), jnp.float32, 0.5, 1.5),
        "bn1_eps": 1e-5,
        "se_wd":   nrm(ks[5], (C, C), (1.0 / C) ** 0.5),
        "se_bd":   0.1 * nrm(ks[6], (C,)),
        "se_wu":   nrm(ks[7], (C, C), (1.0 / C) ** 0.5),
        "se_bu":   0.1 * nrm(ks[8], (C,)),
        "pw1_w":   nrm(ks[9], (FFN, C), (1.0 / C) ** 0.5),
        "pw1_b":   0.1 * nrm(ks[10], (FFN,)),
        "grn_g":   0.3 * nrm(ks[11], (FFN,)),
        "grn_b":   0.1 * nrm(ks[12], (FFN,)),
        "pw2_w":   nrm(ks[13], (C, FFN), (1.0 / FFN) ** 0.5),
        "bn2_w":   1.0 + 0.1 * nrm(ks[14], (C,)),
        "bn2_b":   0.1 * nrm(ks[15], (C,)),
        "bn2_rm":  0.1 * nrm(ks[16], (C,)),
        "bn2_rv":  jax.random.uniform(ks[17], (C,), jnp.float32, 0.5, 1.5),
        "bn2_eps": 1e-5,
        "gamma_ls": jax.random.uniform(ks[18], (C,), jnp.float32, 0.5, 1.5),
    }
    x = nrm(ks[19], (N, C, H, W))

    out = unireplknet_block(x, params, kernel_size=K)
    out = jax.block_until_ready(out)
    assert out.shape == (N, C, H, W), out.shape

    ref = _reference_forward(x, params, K)
    max_abs = float(jnp.max(jnp.abs(out - ref)))
    ref_scale = float(jnp.max(jnp.abs(ref)))
    rel = max_abs / max(ref_scale, 1e-6)
    # abs tolerance covers bf16 MXU operands + tanh-GELU (|err| ~ few e-3 after the
    # residual branch); the normalized check guards against O(1) indexing/layout bugs.
    if max_abs > 5e-2 or rel > 2e-2:
        raise AssertionError(
            f"kernel/reference mismatch: max abs err = {max_abs}, rel = {rel}")
    print("KERNEL_OK")
</pallas_src>

<mosaic_0001>
module attributes {stable_mosaic.version = 11 : i64} {
  func.func @_unireplk_block_kernel(%arg0: i32, %arg1: memref<1x4x404xf32, #tpu.memory_space<vmem>>, %arg2: memref<1x320xf32, #tpu.memory_space<vmem>>, %arg3: memref<4x25xf32, #tpu.memory_space<vmem>>, %arg4: memref<4x1xf32, #tpu.memory_space<vmem>>, %arg5: memref<4x4xbf16, #tpu.memory_space<vmem>>, %arg6: memref<4x1xf32, #tpu.memory_space<vmem>>, %arg7: memref<4x4xbf16, #tpu.memory_space<vmem>>, %arg8: memref<4x1xf32, #tpu.memory_space<vmem>>, %arg9: memref<16x4xbf16, #tpu.memory_space<vmem>>, %arg10: memref<16x1xf32, #tpu.memory_space<vmem>>, %arg11: memref<16x1xf32, #tpu.memory_space<vmem>>, %arg12: memref<16x1xf32, #tpu.memory_space<vmem>>, %arg13: memref<4x16xbf16, #tpu.memory_space<vmem>>, %arg14: memref<4x1xf32, #tpu.memory_space<vmem>>, %arg15: memref<1x4x320xf32, #tpu.memory_space<vmem>>) attributes {dimension_semantics = [#tpu.dimension_semantics<parallel>], iteration_bounds = array<i64: 2>, scalar_prefetch = 0 : i64, scratch_operands = 0 : i64, tpu.core_type = #tpu.core_type<tc>, window_params = [{transform_indices = @transform_0, window_bounds = array<i64: 1, 4, 404>}, {pipeline_mode = #tpu.pipeline_mode<synchronous>, transform_indices = @transform_1, window_bounds = array<i64: 1, 320>}, {pipeline_mode = #tpu.pipeline_mode<synchronous>, transform_indices = @transform_2, window_bounds = array<i64: 4, 25>}, {pipeline_mode = #tpu.pipeline_mode<synchronous>, transform_indices = @transform_3, window_bounds = array<i64: 4, 1>}, {pipeline_mode = #tpu.pipeline_mode<synchronous>, transform_indices = @transform_4, window_bounds = array<i64: 4, 4>}, {pipeline_mode = #tpu.pipeline_mode<synchronous>, transform_indices = @transform_5, window_bounds = array<i64: 4, 1>}, {pipeline_mode = #tpu.pipeline_mode<synchronous>, transform_indices = @transform_6, window_bounds = array<i64: 4, 4>}, {pipeline_mode = #tpu.pipeline_mode<synchronous>, transform_indices = @transform_7, window_bounds = array<i64: 4, 1>}, {pipeline_mode = #tpu.pipeline_mode<synchronous>, transform_indices = @transform_8, window_bounds = array<i64: 16, 4>}, {pipeline_mode = #tpu.pipeline_mode<synchronous>, transform_indices = @transform_9, window_bounds = array<i64: 16, 1>}, {pipeline_mode = #tpu.pipeline_mode<synchronous>, transform_indices = @transform_10, window_bounds = array<i64: 16, 1>}, {pipeline_mode = #tpu.pipeline_mode<synchronous>, transform_indices = @transform_11, window_bounds = array<i64: 16, 1>}, {pipeline_mode = #tpu.pipeline_mode<synchronous>, transform_indices = @transform_12, window_bounds = array<i64: 4, 16>}, {pipeline_mode = #tpu.pipeline_mode<synchronous>, transform_indices = @transform_13, window_bounds = array<i64: 4, 1>}, {transform_indices = @transform_14, window_bounds = array<i64: 1, 4, 320>}]} {
    %c0 = arith.constant 0 : index
    %c0_0 = arith.constant 0 : index
    %0 = vector.load %arg3[%c0, %c0_0] : memref<4x25xf32, #tpu.memory_space<vmem>>, vector<4x25xf32>
    %cst = arith.constant 0.000000e+00 : f32
    %1 = vector.broadcast %cst : f32 to vector<4x320xf32>
    %2 = vector.extract_strided_slice %0 {offsets = [0, 0], sizes = [4, 1], strides = [1, 1]} : vector<4x25xf32> to vector<4x1xf32>
    %c0_1 = arith.constant 0 : index
    %c0_2 = arith.constant 0 : index
    %c0_3 = arith.constant 0 : index
    %3 = vector.load %arg1[%c0_1, %c0_2, %c0_3] : memref<1x4x404xf32, #tpu.memory_space<vmem>>, vector<1x4x320xf32>
    %4 = vector.shape_cast %3 : vector<1x4x320xf32> to vector<4x320xf32>
    %5 = vector.broadcast %2 : vector<4x1xf32> to vector<4x320xf32>
    %6 = arith.mulf %5, %4 : vector<4x320xf32>
    %7 = arith.addf %1, %6 : vector<4x320xf32>
    %8 = vector.extract_strided_slice %0 {offsets = [0, 1], sizes = [4, 1], strides = [1, 1]} : vector<4x25xf32> to vector<4x1xf32>
    %c0_4 = arith.constant 0 : index
    %c0_5 = arith.constant 0 : index
    %c1 = arith.constant 1 : index
    %9 = vector.load %arg1[%c0_4, %c0_5, %c1] : memref<1x4x404xf32, #tpu.memory_space<vmem>>, vector<1x4x320xf32>
    %10 = vector.shape_cast %9 : vector<1x4x320xf32> to vector<4x320xf32>
    %11 = vector.broadcast %8 : vector<4x1xf32> to vector<4x320xf32>
    %12 = arith.mulf %11, %10 : vector<4x320xf32>
    %13 = arith.addf %7, %12 : vector<4x320xf32>
    %14 = vector.extract_strided_slice %0 {offsets = [0, 2], sizes = [4, 1], strides = [1, 1]} : vector<4x25xf32> to vector<4x1xf32>
    %c0_6 = arith.constant 0 : index
    %c0_7 = arith.constant 0 : index
    %c2 = arith.constant 2 : index
    %15 = vector.load %arg1[%c0_6, %c0_7, %c2] : memref<1x4x404xf32, #tpu.memory_space<vmem>>, vector<1x4x320xf32>
    %16 = vector.shape_cast %15 : vector<1x4x320xf32> to vector<4x320xf32>
    %17 = vector.broadcast %14 : vector<4x1xf32> to vector<4x320xf32>
    %18 = arith.mulf %17, %16 : vector<4x320xf32>
    %19 = arith.addf %13, %18 : vector<4x320xf32>
    %20 = vector.extract_strided_slice %0 {offsets = [0, 3], sizes = [4, 1], strides = [1, 1]} : vector<4x25xf32> to vector<4x1xf32>
    %c0_8 = arith.constant 0 : index
    %c0_9 = arith.constant 0 : index
    %c3 = arith.constant 3 : index
    %21 = vector.load %arg1[%c0_8, %c0_9, %c3] : memref<1x4x404xf32, #tpu.memory_space<vmem>>, vector<1x4x320xf32>
    %22 = vector.shape_cast %21 : vector<1x4x320xf32> to vector<4x320xf32>
    %23 = vector.broadcast %20 : vector<4x1xf32> to vector<4x320xf32>
    %24 = arith.mulf %23, %22 : vector<4x320xf32>
    %25 = arith.addf %19, %24 : vector<4x320xf32>
    %26 = vector.extract_strided_slice %0 {offsets = [0, 4], sizes = [4, 1], strides = [1, 1]} : vector<4x25xf32> to vector<4x1xf32>
    %c0_10 = arith.constant 0 : index
    %c0_11 = arith.constant 0 : index
    %c4 = arith.constant 4 : index
    %27 = vector.load %arg1[%c0_10, %c0_11, %c4] : memref<1x4x404xf32, #tpu.memory_space<vmem>>, vector<1x4x320xf32>
    %28 = vector.shape_cast %27 : vector<1x4x320xf32> to vector<4x320xf32>
    %29 = vector.broadcast %26 : vector<4x1xf32> to vector<4x320xf32>
    %30 = arith.mulf %29, %28 : vector<4x320xf32>
    %31 = arith.addf %25, %30 : vector<4x320xf32>
    %32 = vector.extract_strided_slice %0 {offsets = [0, 5], sizes = [4, 1], strides = [1, 1]} : vector<4x25xf32> to vector<4x1xf32>
    %c0_12 = arith.constant 0 : index
    %c0_13 = arith.constant 0 : index
    %c20 = arith.constant 20 : index
    %33 = vector.load %arg1[%c0_12, %c0_13, %c20] : memref<1x4x404xf32, #tpu.memory_space<vmem>>, vector<1x4x320xf32>
    %34 = vector.shape_cast %33 : vector<1x4x320xf32> to vector<4x320xf32>
    %35 = vector.broadcast %32 : vector<4x1xf32> to vector<4x320xf32>
    %36 = arith.mulf %35, %34 : vector<4x320xf32>
    %37 = arith.addf %31, %36 : vector<4x320xf32>
    %38 = vector.extract_strided_slice %0 {offsets = [0, 6], sizes = [4, 1], strides = [1, 1]} : vector<4x25xf32> to vector<4x1xf32>
    %c0_14 = arith.constant 0 : index
    %c0_15 = arith.constant 0 : index
    %c21 = arith.constant 21 : index
    %39 = vector.load %arg1[%c0_14, %c0_15, %c21] : memref<1x4x404xf32, #tpu.memory_space<vmem>>, vector<1x4x320xf32>
    %40 = vector.shape_cast %39 : vector<1x4x320xf32> to vector<4x320xf32>
    %41 = vector.broadcast %38 : vector<4x1xf32> to vector<4x320xf32>
    %42 = arith.mulf %41, %40 : vector<4x320xf32>
    %43 = arith.addf %37, %42 : vector<4x320xf32>
    %44 = vector.extract_strided_slice %0 {offsets = [0, 7], sizes = [4, 1], strides = [1, 1]} : vector<4x25xf32> to vector<4x1xf32>
    %c0_16 = arith.constant 0 : index
    %c0_17 = arith.constant 0 : index
    %c22 = arith.constant 22 : index
    %45 = vector.load %arg1[%c0_16, %c0_17, %c22] : memref<1x4x404xf32, #tpu.memory_space<vmem>>, vector<1x4x320xf32>
    %46 = vector.shape_cast %45 : vector<1x4x320xf32> to vector<4x320xf32>
    %47 = vector.broadcast %44 : vector<4x1xf32> to vector<4x320xf32>
    %48 = arith.mulf %47, %46 : vector<4x320xf32>
    %49 = arith.addf %43, %48 : vector<4x320xf32>
    %50 = vector.extract_strided_slice %0 {offsets = [0, 8], sizes = [4, 1], strides = [1, 1]} : vector<4x25xf32> to vector<4x1xf32>
    %c0_18 = arith.constant 0 : index
    %c0_19 = arith.constant 0 : index
    %c23 = arith.constant 23 : index
    %51 = vector.load %arg1[%c0_18, %c0_19, %c23] : memref<1x4x404xf32, #tpu.memory_space<vmem>>, vector<1x4x320xf32>
    %52 = vector.shape_cast %51 : vector<1x4x320xf32> to vector<4x320xf32>
    %53 = vector.broadcast %50 : vector<4x1xf32> to vector<4x320xf32>
    %54 = arith.mulf %53, %52 : vector<4x320xf32>
    %55 = arith.addf %49, %54 : vector<4x320xf32>
    %56 = vector.extract_strided_slice %0 {offsets = [0, 9], sizes = [4, 1], strides = [1, 1]} : vector<4x25xf32> to vector<4x1xf32>
    %c0_20 = arith.constant 0 : index
    %c0_21 = arith.constant 0 : index
    %c24 = arith.constant 24 : index
    %57 = vector.load %arg1[%c0_20, %c0_21, %c24] : memref<1x4x404xf32, #tpu.memory_space<vmem>>, vector<1x4x320xf32>
    %58 = vector.shape_cast %57 : vector<1x4x320xf32> to vector<4x320xf32>
    %59 = vector.broadcast %56 : vector<4x1xf32> to vector<4x320xf32>
    %60 = arith.mulf %59, %58 : vector<4x320xf32>
    %61 = arith.addf %55, %60 : vector<4x320xf32>
    %62 = vector.extract_strided_slice %0 {offsets = [0, 10], sizes = [4, 1], strides = [1, 1]} : vector<4x25xf32> to vector<4x1xf32>
    %c0_22 = arith.constant 0 : index
    %c0_23 = arith.constant 0 : index
    %c40 = arith.constant 40 : index
    %63 = vector.load %arg1[%c0_22, %c0_23, %c40] : memref<1x4x404xf32, #tpu.memory_space<vmem>>, vector<1x4x320xf32>
    %64 = vector.shape_cast %63 : vector<1x4x320xf32> to vector<4x320xf32>
    %65 = vector.broadcast %62 : vector<4x1xf32> to vector<4x320xf32>
    %66 = arith.mulf %65, %64 : vector<4x320xf32>
    %67 = arith.addf %61, %66 : vector<4x320xf32>
    %68 = vector.extract_strided_slice %0 {offsets = [0, 11], sizes = [4, 1], strides = [1, 1]} : vector<4x25xf32> to vector<4x1xf32>
    %c0_24 = arith.constant 0 : index
    %c0_25 = arith.constant 0 : index
    %c41 = arith.constant 41 : index
    %69 = vector.load %arg1[%c0_24, %c0_25, %c41] : memref<1x4x404xf32, #tpu.memory_space<vmem>>, vector<1x4x320xf32>
    %70 = vector.shape_cast %69 : vector<1x4x320xf32> to vector<4x320xf32>
    %71 = vector.broadcast %68 : vector<4x1xf32> to vector<4x320xf32>
    %72 = arith.mulf %71, %70 : vector<4x320xf32>
    %73 = arith.addf %67, %72 : vector<4x320xf32>
    %74 = vector.extract_strided_slice %0 {offsets = [0, 12], sizes = [4, 1], strides = [1, 1]} : vector<4x25xf32> to vector<4x1xf32>
    %c0_26 = arith.constant 0 : index
    %c0_27 = arith.constant 0 : index
    %c42 = arith.constant 42 : index
    %75 = vector.load %arg1[%c0_26, %c0_27, %c42] : memref<1x4x404xf32, #tpu.memory_space<vmem>>, vector<1x4x320xf32>
    %76 = vector.shape_cast %75 : vector<1x4x320xf32> to vector<4x320xf32>
    %77 = vector.broadcast %74 : vector<4x1xf32> to vector<4x320xf32>
    %78 = arith.mulf %77, %76 : vector<4x320xf32>
    %79 = arith.addf %73, %78 : vector<4x320xf32>
    %80 = vector.extract_strided_slice %0 {offsets = [0, 13], sizes = [4, 1], strides = [1, 1]} : vector<4x25xf32> to vector<4x1xf32>
    %c0_28 = arith.constant 0 : index
    %c0_29 = arith.constant 0 : index
    %c43 = arith.constant 43 : index
    %81 = vector.load %arg1[%c0_28, %c0_29, %c43] : memref<1x4x404xf32, #tpu.memory_space<vmem>>, vector<1x4x320xf32>
    %82 = vector.shape_cast %81 : vector<1x4x320xf32> to vector<4x320xf32>
    %83 = vector.broadcast %80 : vector<4x1xf32> to vector<4x320xf32>
    %84 = arith.mulf %83, %82 : vector<4x320xf32>
    %85 = arith.addf %79, %84 : vector<4x320xf32>
    %86 = vector.extract_strided_slice %0 {offsets = [0, 14], sizes = [4, 1], strides = [1, 1]} : vector<4x25xf32> to vector<4x1xf32>
    %c0_30 = arith.constant 0 : index
    %c0_31 = arith.constant 0 : index
    %c44 = arith.constant 44 : index
    %87 = vector.load %arg1[%c0_30, %c0_31, %c44] : memref<1x4x404xf32, #tpu.memory_space<vmem>>, vector<1x4x320xf32>
    %88 = vector.shape_cast %87 : vector<1x4x320xf32> to vector<4x320xf32>
    %89 = vector.broadcast %86 : vector<4x1xf32> to vector<4x320xf32>
    %90 = arith.mulf %89, %88 : vector<4x320xf32>
    %91 = arith.addf %85, %90 : vector<4x320xf32>
    %92 = vector.extract_strided_slice %0 {offsets = [0, 15], sizes = [4, 1], strides = [1, 1]} : vector<4x25xf32> to vector<4x1xf32>
    %c0_32 = arith.constant 0 : index
    %c0_33 = arith.constant 0 : index
    %c60 = arith.constant 60 : index
    %93 = vector.load %arg1[%c0_32, %c0_33, %c60] : memref<1x4x404xf32, #tpu.memory_space<vmem>>, vector<1x4x320xf32>
    %94 = vector.shape_cast %93 : vector<1x4x320xf32> to vector<4x320xf32>
    %95 = vector.broadcast %92 : vector<4x1xf32> to vector<4x320xf32>
    %96 = arith.mulf %95, %94 : vector<4x320xf32>
    %97 = arith.addf %91, %96 : vector<4x320xf32>
    %98 = vector.extract_strided_slice %0 {offsets = [0, 16], sizes = [4, 1], strides = [1, 1]} : vector<4x25xf32> to vector<4x1xf32>
    %c0_34 = arith.constant 0 : index
    %c0_35 = arith.constant 0 : index
    %c61 = arith.constant 61 : index
    %99 = vector.load %arg1[%c0_34, %c0_35, %c61] : memref<1x4x404xf32, #tpu.memory_space<vmem>>, vector<1x4x320xf32>
    %100 = vector.shape_cast %99 : vector<1x4x320xf32> to vector<4x320xf32>
    %101 = vector.broadcast %98 : vector<4x1xf32> to vector<4x320xf32>
    %102 = arith.mulf %101, %100 : vector<4x320xf32>
    %103 = arith.addf %97, %102 : vector<4x320xf32>
    %104 = vector.extract_strided_slice %0 {offsets = [0, 17], sizes = [4, 1], strides = [1, 1]} : vector<4x25xf32> to vector<4x1xf32>
    %c0_36 = arith.constant 0 : index
    %c0_37 = arith.constant 0 : index
    %c62 = arith.constant 62 : index
    %105 = vector.load %arg1[%c0_36, %c0_37, %c62] : memref<1x4x404xf32, #tpu.memory_space<vmem>>, vector<1x4x320xf32>
    %106 = vector.shape_cast %105 : vector<1x4x320xf32> to vector<4x320xf32>
    %107 = vector.broadcast %104 : vector<4x1xf32> to vector<4x320xf32>
    %108 = arith.mulf %107, %106 : vector<4x320xf32>
    %109 = arith.addf %103, %108 : vector<4x320xf32>
    %110 = vector.extract_strided_slice %0 {offsets = [0, 18], sizes = [4, 1], strides = [1, 1]} : vector<4x25xf32> to vector<4x1xf32>
    %c0_38 = arith.constant 0 : index
    %c0_39 = arith.constant 0 : index
    %c63 = arith.constant 63 : index
    %111 = vector.load %arg1[%c0_38, %c0_39, %c63] : memref<1x4x404xf32, #tpu.memory_space<vmem>>, vector<1x4x320xf32>
    %112 = vector.shape_cast %111 : vector<1x4x320xf32> to vector<4x320xf32>
    %113 = vector.broadcast %110 : vector<4x1xf32> to vector<4x320xf32>
    %114 = arith.mulf %113, %112 : vector<4x320xf32>
    %115 = arith.addf %109, %114 : vector<4x320xf32>
    %116 = vector.extract_strided_slice %0 {offsets = [0, 19], sizes = [4, 1], strides = [1, 1]} : vector<4x25xf32> to vector<4x1xf32>
    %c0_40 = arith.constant 0 : index
    %c0_41 = arith.constant 0 : index
    %c64 = arith.constant 64 : index
    %117 = vector.load %arg1[%c0_40, %c0_41, %c64] : memref<1x4x404xf32, #tpu.memory_space<vmem>>, vector<1x4x320xf32>
    %118 = vector.shape_cast %117 : vector<1x4x320xf32> to vector<4x320xf32>
    %119 = vector.broadcast %116 : vector<4x1xf32> to vector<4x320xf32>
    %120 = arith.mulf %119, %118 : vector<4x320xf32>
    %121 = arith.addf %115, %120 : vector<4x320xf32>
    %122 = vector.extract_strided_slice %0 {offsets = [0, 20], sizes = [4, 1], strides = [1, 1]} : vector<4x25xf32> to vector<4x1xf32>
    %c0_42 = arith.constant 0 : index
    %c0_43 = arith.constant 0 : index
    %c80 = arith.constant 80 : index
    %123 = vector.load %arg1[%c0_42, %c0_43, %c80] : memref<1x4x404xf32, #tpu.memory_space<vmem>>, vector<1x4x320xf32>
    %124 = vector.shape_cast %123 : vector<1x4x320xf32> to vector<4x320xf32>
    %125 = vector.broadcast %122 : vector<4x1xf32> to vector<4x320xf32>
    %126 = arith.mulf %125, %124 : vector<4x320xf32>
    %127 = arith.addf %121, %126 : vector<4x320xf32>
    %128 = vector.extract_strided_slice %0 {offsets = [0, 21], sizes = [4, 1], strides = [1, 1]} : vector<4x25xf32> to vector<4x1xf32>
    %c0_44 = arith.constant 0 : index
    %c0_45 = arith.constant 0 : index
    %c81 = arith.constant 81 : index
    %129 = vector.load %arg1[%c0_44, %c0_45, %c81] : memref<1x4x404xf32, #tpu.memory_space<vmem>>, vector<1x4x320xf32>
    %130 = vector.shape_cast %129 : vector<1x4x320xf32> to vector<4x320xf32>
    %131 = vector.broadcast %128 : vector<4x1xf32> to vector<4x320xf32>
    %132 = arith.mulf %131, %130 : vector<4x320xf32>
    %133 = arith.addf %127, %132 : vector<4x320xf32>
    %134 = vector.extract_strided_slice %0 {offsets = [0, 22], sizes = [4, 1], strides = [1, 1]} : vector<4x25xf32> to vector<4x1xf32>
    %c0_46 = arith.constant 0 : index
    %c0_47 = arith.constant 0 : index
    %c82 = arith.constant 82 : index
    %135 = vector.load %arg1[%c0_46, %c0_47, %c82] : memref<1x4x404xf32, #tpu.memory_space<vmem>>, vector<1x4x320xf32>
    %136 = vector.shape_cast %135 : vector<1x4x320xf32> to vector<4x320xf32>
    %137 = vector.broadcast %134 : vector<4x1xf32> to vector<4x320xf32>
    %138 = arith.mulf %137, %136 : vector<4x320xf32>
    %139 = arith.addf %133, %138 : vector<4x320xf32>
    %140 = vector.extract_strided_slice %0 {offsets = [0, 23], sizes = [4, 1], strides = [1, 1]} : vector<4x25xf32> to vector<4x1xf32>
    %c0_48 = arith.constant 0 : index
    %c0_49 = arith.constant 0 : index
    %c83 = arith.constant 83 : index
    %141 = vector.load %arg1[%c0_48, %c0_49, %c83] : memref<1x4x404xf32, #tpu.memory_space<vmem>>, vector<1x4x320xf32>
    %142 = vector.shape_cast %141 : vector<1x4x320xf32> to vector<4x320xf32>
    %143 = vector.broadcast %140 : vector<4x1xf32> to vector<4x320xf32>
    %144 = arith.mulf %143, %142 : vector<4x320xf32>
    %145 = arith.addf %139, %144 : vector<4x320xf32>
    %146 = vector.extract_strided_slice %0 {offsets = [0, 24], sizes = [4, 1], strides = [1, 1]} : vector<4x25xf32> to vector<4x1xf32>
    %c0_50 = arith.constant 0 : index
    %c0_51 = arith.constant 0 : index
    %c84 = arith.constant 84 : index
    %147 = vector.load %arg1[%c0_50, %c0_51, %c84] : memref<1x4x404xf32, #tpu.memory_space<vmem>>, vector<1x4x320xf32>
    %148 = vector.shape_cast %147 : vector<1x4x320xf32> to vector<4x320xf32>
    %149 = vector.broadcast %146 : vector<4x1xf32> to vector<4x320xf32>
    %150 = arith.mulf %149, %148 : vector<4x320xf32>
    %151 = arith.addf %145, %150 : vector<4x320xf32>
    %c0_52 = arith.constant 0 : index
    %c0_53 = arith.constant 0 : index
    %152 = vector.load %arg4[%c0_52, %c0_53] : memref<4x1xf32, #tpu.memory_space<vmem>>, vector<4x1xf32>
    %153 = vector.broadcast %152 : vector<4x1xf32> to vector<4x320xf32>
    %154 = arith.addf %151, %153 : vector<4x320xf32>
    %c0_54 = arith.constant 0 : index
    %c0_55 = arith.constant 0 : index
    %155 = vector.load %arg2[%c0_54, %c0_55] : memref<1x320xf32, #tpu.memory_space<vmem>>, vector<1x320xf32>
    %156 = vector.broadcast %155 : vector<1x320xf32> to vector<4x320xf32>
    %157 = arith.mulf %154, %156 : vector<4x320xf32>
    %cst_56 = arith.constant dense<0.000000e+00> : vector<4xf32>
    %158 = vector.multi_reduction <add>, %157, %cst_56 [1] : vector<4x320xf32> to vector<4xf32>
    %159 = vector.shape_cast %158 : vector<4xf32> to vector<4x1xf32>
    %cst_57 = arith.constant 3.906250e-03 : f32
    %160 = vector.broadcast %cst_57 : f32 to vector<4x1xf32>
    %161 = arith.mulf %159, %160 : vector<4x1xf32>
    %162 = arith.truncf %161 : vector<4x1xf32> to vector<4x1xbf16>
    %c0_58 = arith.constant 0 : index
    %c0_59 = arith.constant 0 : index
    %163 = vector.load %arg5[%c0_58, %c0_59] : memref<4x4xbf16, #tpu.memory_space<vmem>>, vector<4x4xbf16>
    %cst_60 = arith.constant dense<0.000000e+00> : vector<4x1xf32>
    %164 = tpu.matmul %163, %162, %cst_60 {dimension_numbers = #tpu.dot_dimension_numbers<[1], [0], [0], [1], [0, 0, 1, 1], [], []>} : vector<4x4xbf16>, vector<4x1xbf16>, vector<4x1xf32> -> vector<4x1xf32>
    %c0_61 = arith.constant 0 : index
    %c0_62 = arith.constant 0 : index
    %165 = vector.load %arg6[%c0_61, %c0_62] : memref<4x1xf32, #tpu.memory_space<vmem>>, vector<4x1xf32>
    %166 = arith.addf %164, %165 : vector<4x1xf32>
    %cst_63 = arith.constant 0.000000e+00 : f32
    %167 = vector.broadcast %cst_63 : f32 to vector<4x1xf32>
    %168 = arith.maximumf %166, %167 : vector<4x1xf32>
    %169 = arith.truncf %168 : vector<4x1xf32> to vector<4x1xbf16>
    %c0_64 = arith.constant 0 : index
    %c0_65 = arith.constant 0 : index
    %170 = vector.load %arg7[%c0_64, %c0_65] : memref<4x4xbf16, #tpu.memory_space<vmem>>, vector<4x4xbf16>
    %cst_66 = arith.constant dense<0.000000e+00> : vector<4x1xf32>
    %171 = tpu.matmul %170, %169, %cst_66 {dimension_numbers = #tpu.dot_dimension_numbers<[1], [0], [0], [1], [0, 0, 1, 1], [], []>} : vector<4x4xbf16>, vector<4x1xbf16>, vector<4x1xf32> -> vector<4x1xf32>
    %c0_67 = arith.constant 0 : index
    %c0_68 = arith.constant 0 : index
    %172 = vector.load %arg8[%c0_67, %c0_68] : memref<4x1xf32, #tpu.memory_space<vmem>>, vector<4x1xf32>
    %173 = arith.addf %171, %172 : vector<4x1xf32>
    %cst_69 = arith.constant 0.000000e+00 : f32
    %174 = vector.broadcast %cst_69 : f32 to vector<4x1xf32>
    %175 = arith.subf %174, %173 : vector<4x1xf32>
    %176 = math.exp %175 : vector<4x1xf32>
    %cst_70 = arith.constant 1.000000e+00 : f32
    %177 = vector.broadcast %cst_70 : f32 to vector<4x1xf32>
    %178 = arith.addf %177, %176 : vector<4x1xf32>
    %179 = tpu.reciprocal %178 {approx = true} : vector<4x1xf32> -> vector<4x1xf32>
    %180 = vector.broadcast %179 : vector<4x1xf32> to vector<4x320xf32>
    %181 = arith.mulf %157, %180 : vector<4x320xf32>
    %c0_71 = arith.constant 0 : index
    %c0_72 = arith.constant 0 : index
    %182 = vector.load %arg9[%c0_71, %c0_72] : memref<16x4xbf16, #tpu.memory_space<vmem>>, vector<16x4xbf16>
    %183 = arith.truncf %181 : vector<4x320xf32> to vector<4x320xbf16>
    %cst_73 = arith.constant dense<0.000000e+00> : vector<16x320xf32>
    %184 = tpu.matmul %182, %183, %cst_73 {dimension_numbers = #tpu.dot_dimension_numbers<[1], [0], [0], [1], [0, 0, 1, 1], [], []>} : vector<16x4xbf16>, vector<4x320xbf16>, vector<16x320xf32> -> vector<16x320xf32>
    %c0_74 = arith.constant 0 : index
    %c0_75 = arith.constant 0 : index
    %185 = vector.load %arg10[%c0_74, %c0_75] : memref<16x1xf32, #tpu.memory_space<vmem>>, vector<16x1xf32>
    %186 = vector.broadcast %185 : vector<16x1xf32> to vector<16x320xf32>
    %187 = arith.addf %184, %186 : vector<16x320xf32>
    %cst_76 = arith.constant 5.000000e-01 : f32
    %188 = vector.broadcast %cst_76 : f32 to vector<16x320xf32>
    %189 = arith.mulf %188, %187 : vector<16x320xf32>
    %cst_77 = arith.constant 4.471500e-02 : f32
    %190 = vector.broadcast %cst_77 : f32 to vector<16x320xf32>
    %191 = arith.mulf %190, %187 : vector<16x320xf32>
    %192 = arith.mulf %191, %187 : vector<16x320xf32>
    %193 = arith.mulf %192, %187 : vector<16x320xf32>
    %194 = arith.addf %187, %193 : vector<16x320xf32>
    %cst_78 = arith.constant 0.797884583 : f32
    %195 = vector.broadcast %cst_78 : f32 to vector<16x320xf32>
    %196 = arith.mulf %195, %194 : vector<16x320xf32>
    %197 = math.tanh %196 : vector<16x320xf32>
    %cst_79 = arith.constant 1.000000e+00 : f32
    %198 = vector.broadcast %cst_79 : f32 to vector<16x320xf32>
    %199 = arith.addf %198, %197 : vector<16x320xf32>
    %200 = arith.mulf %189, %199 : vector<16x320xf32>
    %201 = vector.broadcast %155 : vector<1x320xf32> to vector<16x320xf32>
    %202 = arith.mulf %200, %201 : vector<16x320xf32>
    %203 = arith.mulf %202, %202 : vector<16x320xf32>
    %cst_80 = arith.constant dense<0.000000e+00> : vector<16xf32>
    %204 = vector.multi_reduction <add>, %203, %cst_80 [1] : vector<16x320xf32> to vector<16xf32>
    %205 = vector.shape_cast %204 : vector<16xf32> to vector<16x1xf32>
    %206 = math.sqrt %205 : vector<16x1xf32>
    %cst_81 = arith.constant dense<0.000000e+00> : vector<1xf32>
    %207 = vector.multi_reduction <add>, %206, %cst_81 [0] : vector<16x1xf32> to vector<1xf32>
    %208 = vector.shape_cast %207 : vector<1xf32> to vector<1x1xf32>
    %cst_82 = arith.constant 1.600000e+01 : f32
    %209 = vector.broadcast %cst_82 : f32 to vector<1x1xf32>
    %210 = arith.divf %208, %209 : vector<1x1xf32>
    %cst_83 = arith.constant 9.99999997E-7 : f32
    %211 = vector.broadcast %cst_83 : f32 to vector<1x1xf32>
    %212 = arith.addf %210, %211 : vector<1x1xf32>
    %213 = tpu.reciprocal %212 {approx = true} : vector<1x1xf32> -> vector<1x1xf32>
    %214 = vector.broadcast %213 : vector<1x1xf32> to vector<16x1xf32>
    %215 = arith.mulf %206, %214 : vector<16x1xf32>
    %c0_84 = arith.constant 0 : index
    %c0_85 = arith.constant 0 : index
    %216 = vector.load %arg11[%c0_84, %c0_85] : memref<16x1xf32, #tpu.memory_space<vmem>>, vector<16x1xf32>
    %217 = arith.mulf %216, %215 : vector<16x1xf32>
    %cst_86 = arith.constant 1.000000e+00 : f32
    %218 = vector.broadcast %cst_86 : f32 to vector<16x1xf32>
    %219 = arith.addf %217, %218 : vector<16x1xf32>
    %220 = vector.broadcast %219 : vector<16x1xf32> to vector<16x320xf32>
    %221 = arith.mulf %220, %202 : vector<16x320xf32>
    %c0_87 = arith.constant 0 : index
    %c0_88 = arith.constant 0 : index
    %222 = vector.load %arg12[%c0_87, %c0_88] : memref<16x1xf32, #tpu.memory_space<vmem>>, vector<16x1xf32>
    %223 = vector.broadcast %222 : vector<16x1xf32> to vector<16x320xf32>
    %224 = arith.addf %221, %223 : vector<16x320xf32>
    %c0_89 = arith.constant 0 : index
    %c0_90 = arith.constant 0 : index
    %225 = vector.load %arg13[%c0_89, %c0_90] : memref<4x16xbf16, #tpu.memory_space<vmem>>, vector<4x16xbf16>
    %226 = arith.truncf %224 : vector<16x320xf32> to vector<16x320xbf16>
    %cst_91 = arith.constant dense<0.000000e+00> : vector<4x320xf32>
    %227 = tpu.matmul %225, %226, %cst_91 {dimension_numbers = #tpu.dot_dimension_numbers<[1], [0], [0], [1], [0, 0, 1, 1], [], []>} : vector<4x16xbf16>, vector<16x320xbf16>, vector<4x320xf32> -> vector<4x320xf32>
    %c0_92 = arith.constant 0 : index
    %c0_93 = arith.constant 0 : index
    %228 = vector.load %arg14[%c0_92, %c0_93] : memref<4x1xf32, #tpu.memory_space<vmem>>, vector<4x1xf32>
    %229 = vector.broadcast %228 : vector<4x1xf32> to vector<4x320xf32>
    %230 = arith.addf %227, %229 : vector<4x320xf32>
    %c0_94 = arith.constant 0 : index
    %c0_95 = arith.constant 0 : index
    %c42_96 = arith.constant 42 : index
    %231 = vector.load %arg1[%c0_94, %c0_95, %c42_96] : memref<1x4x404xf32, #tpu.memory_space<vmem>>, vector<1x4x320xf32>
    %232 = vector.shape_cast %231 : vector<1x4x320xf32> to vector<4x320xf32>
    %233 = arith.addf %232, %230 : vector<4x320xf32>
    %c0_97 = arith.constant 0 : index
    %c0_98 = arith.constant 0 : index
    %c0_99 = arith.constant 0 : index
    %234 = vector.load %arg15[%c0_97, %c0_98, %c0_99] : memref<1x4x320xf32, #tpu.memory_space<vmem>>, vector<1x4x320xf32>
    %235 = vector.shape_cast %234 : vector<1x4x320xf32> to vector<4x320xf32>
    %236 = vector.shape_cast %233 : vector<4x320xf32> to vector<1x4x320xf32>
    tpu.vector_store %arg15[%c0_97, %c0_98, %c0_99], %236 {strides = array<i32>} : memref<1x4x320xf32, #tpu.memory_space<vmem>>, vector<1x4x320xf32>,
    return
  }
  func.func @transform_0(%arg0: i32) -> (i32, i32, i32) {
    %c0_i32 = arith.constant 0 : i32
    %c0_i32_0 = arith.constant 0 : i32
    %c0_i32_1 = arith.constant 0 : i32
    return %arg0, %c0_i32, %c0_i32_0 : i32, i32, i32
  }
  func.func @transform_1(%arg0: i32) -> (i32, i32) {
    %c0_i32 = arith.constant 0 : i32
    %c0_i32_0 = arith.constant 0 : i32
    %c0_i32_1 = arith.constant 0 : i32
    return %c0_i32, %c0_i32_0 : i32, i32
  }
  func.func @transform_2(%arg0: i32) -> (i32, i32) {
    %c0_i32 = arith.constant 0 : i32
    %c0_i32_0 = arith.constant 0 : i32
    %c0_i32_1 = arith.constant 0 : i32
    return %c0_i32, %c0_i32_0 : i32, i32
  }
  func.func @transform_3(%arg0: i32) -> (i32, i32) {
    %c0_i32 = arith.constant 0 : i32
    %c0_i32_0 = arith.constant 0 : i32
    %c0_i32_1 = arith.constant 0 : i32
    return %c0_i32, %c0_i32_0 : i32, i32
  }
  func.func @transform_4(%arg0: i32) -> (i32, i32) {
    %c0_i32 = arith.constant 0 : i32
    %c0_i32_0 = arith.constant 0 : i32
    %c0_i32_1 = arith.constant 0 : i32
    return %c0_i32, %c0_i32_0 : i32, i32
  }
  func.func @transform_5(%arg0: i32) -> (i32, i32) {
    %c0_i32 = arith.constant 0 : i32
    %c0_i32_0 = arith.constant 0 : i32
    %c0_i32_1 = arith.constant 0 : i32
    return %c0_i32, %c0_i32_0 : i32, i32
  }
  func.func @transform_6(%arg0: i32) -> (i32, i32) {
    %c0_i32 = arith.constant 0 : i32
    %c0_i32_0 = arith.constant 0 : i32
    %c0_i32_1 = arith.constant 0 : i32
    return %c0_i32, %c0_i32_0 : i32, i32
  }
  func.func @transform_7(%arg0: i32) -> (i32, i32) {
    %c0_i32 = arith.constant 0 : i32
    %c0_i32_0 = arith.constant 0 : i32
    %c0_i32_1 = arith.constant 0 : i32
    return %c0_i32, %c0_i32_0 : i32, i32
  }
  func.func @transform_8(%arg0: i32) -> (i32, i32) {
    %c0_i32 = arith.constant 0 : i32
    %c0_i32_0 = arith.constant 0 : i32
    %c0_i32_1 = arith.constant 0 : i32
    return %c0_i32, %c0_i32_0 : i32, i32
  }
  func.func @transform_9(%arg0: i32) -> (i32, i32) {
    %c0_i32 = arith.constant 0 : i32
    %c0_i32_0 = arith.constant 0 : i32
    %c0_i32_1 = arith.constant 0 : i32
    return %c0_i32, %c0_i32_0 : i32, i32
  }
  func.func @transform_10(%arg0: i32) -> (i32, i32) {
    %c0_i32 = arith.constant 0 : i32
    %c0_i32_0 = arith.constant 0 : i32
    %c0_i32_1 = arith.constant 0 : i32
    return %c0_i32, %c0_i32_0 : i32, i32
  }
  func.func @transform_11(%arg0: i32) -> (i32, i32) {
    %c0_i32 = arith.constant 0 : i32
    %c0_i32_0 = arith.constant 0 : i32
    %c0_i32_1 = arith.constant 0 : i32
    return %c0_i32, %c0_i32_0 : i32, i32
  }
  func.func @transform_12(%arg0: i32) -> (i32, i32) {
    %c0_i32 = arith.constant 0 : i32
    %c0_i32_0 = arith.constant 0 : i32
    %c0_i32_1 = arith.constant 0 : i32
    return %c0_i32, %c0_i32_0 : i32, i32
  }
  func.func @transform_13(%arg0: i32) -> (i32, i32) {
    %c0_i32 = arith.constant 0 : i32
    %c0_i32_0 = arith.constant 0 : i32
    %c0_i32_1 = arith.constant 0 : i32
    return %c0_i32, %c0_i32_0 : i32, i32
  }
  func.func @transform_14(%arg0: i32) -> (i32, i32, i32) {
    %c0_i32 = arith.constant 0 : i32
    %c0_i32_0 = arith.constant 0 : i32
    %c0_i32_1 = arith.constant 0 : i32
    return %arg0, %c0_i32, %c0_i32_0 : i32, i32, i32
  }
}

</mosaic_0001>

<llo_original>
// kernel: tpu_custom_call.1
$region0: #{tpu_custom_call.1}
  #allocation0 [shape = 'u32[]', space=smem, size = 0x4, offset = 0x4, fixed_abs, tag = 'smem constant byte address 0x4 - core index']
  #allocation1 [shape = 'u32[144,128]{1,0:T(1,128)}', space=vmem, size = 0x12000, scoped, tag = 'internal scratch']
  %s0 = inlined_call_operand.vmem [shape: f32[2,4,404], index: 0, kind: input, shape index: {}]
  %s1 = inlined_call_operand.vmem [shape: f32[1,320], index: 1, kind: input, shape index: {}]
  %s2 = inlined_call_operand.vmem [shape: f32[4,25], index: 2, kind: input, shape index: {}]
  %s3 = inlined_call_operand.vmem [shape: f32[4,1], index: 3, kind: input, shape index: {}]
  %s4 = inlined_call_operand.vmem [shape: bf16[4,4], index: 4, kind: input, shape index: {}]
  %s5 = inlined_call_operand.vmem [shape: f32[4,1], index: 5, kind: input, shape index: {}]
  %s6 = inlined_call_operand.vmem [shape: bf16[4,4], index: 6, kind: input, shape index: {}]
  %s7 = inlined_call_operand.vmem [shape: f32[4,1], index: 7, kind: input, shape index: {}]
  %s8 = inlined_call_operand.vmem [shape: bf16[16,4], index: 8, kind: input, shape index: {}]
  %s9 = inlined_call_operand.vmem [shape: f32[16,1], index: 9, kind: input, shape index: {}]
  %s10 = inlined_call_operand.vmem [shape: f32[16,1], index: 10, kind: input, shape index: {}]
  %s11 = inlined_call_operand.vmem [shape: f32[16,1], index: 11, kind: input, shape index: {}]
  %s12 = inlined_call_operand.vmem [shape: bf16[4,16], index: 12, kind: input, shape index: {}]
  %s13 = inlined_call_operand.vmem [shape: f32[4,1], index: 13, kind: input, shape index: {}]
  %s14 = inlined_call_operand.hbm [shape: f32[2,4,320], index: 14, kind: output, shape index: {}]
  %s15 = sld [smem:[#allocation0]]
  $region89: #{tpu_custom_call.1} parent=0
    _
  %s17 = ssub.s32 1, %s15
  %s18 = scalar_select 0, %s17, %s15
  $region1: #{tpu_custom_call.1} parent=0
    #allocation2 [shape = 'u8[12288]{0}', space=vmem, size = 0x3000, scoped, tag = 'output window, operand 0']
    #allocation3 [shape = 's32[2]{0}', space=sflag, size = 0x8, scoped, tag = 'scoped memory for tpu_custom_call.1']
    %19 = vsyncpa [#allocation3], 0
    %s20 = scalar_lea.sflag [#allocation3], 1
    %21 = vsyncpa %s20, 0
    loop: start=0, step=1, limit=4
    $region2: #{tpu_custom_call.1} parent=1 // loop_pre_header
      _
    $region3: #{tpu_custom_call.1} parent=1 // loop_header
      %s23 = sphi 0, %s27
      %p24 = scmp.ge.s32.totalorder %s23, 4
      %s33 = sphi 0, %s35
      %s36 = sphi 0, %s33
      %s37 = sphi 0, %s36
      %s53 = sphi 0, %s37
      %s57 = sphi 0, %s57
      %s59 = sphi 0, %s57
      %s60 = sphi 0, %s59
      %s74 = sphi 0, %s60
      %s78 = sphi 0, %s78
      %s80 = sphi 0, %s78
      %s81 = sphi 0, %s80
      %s95 = sphi 0, %s81
      %s99 = sphi 0, %s99
      %s101 = sphi 0, %s99
      %s102 = sphi 0, %s101
      %s116 = sphi 0, %s102
      %s120 = sphi 0, %s120
      %s122 = sphi 0, %s120
      %s123 = sphi 0, %s122
      %s137 = sphi 0, %s123
      %s141 = sphi 0, %s141
      %s143 = sphi 0, %s141
      %s144 = sphi 0, %s143
      %s158 = sphi 0, %s144
      %s162 = sphi 0, %s162
      %s164 = sphi 0, %s162
      %s165 = sphi 0, %s164
      %s179 = sphi 0, %s165
      %s183 = sphi 0, %s183
      %s185 = sphi 0, %s183
      %s186 = sphi 0, %s185
      %s200 = sphi 0, %s186
      %s204 = sphi 0, %s204
      %s206 = sphi 0, %s204
      %s207 = sphi 0, %s206
      %s221 = sphi 0, %s207
      %s225 = sphi 0, %s225
      %s227 = sphi 0, %s225
      %s228 = sphi 0, %s227
      %s242 = sphi 0, %s228
      %s246 = sphi 0, %s246
      %s248 = sphi 0, %s246
      %s249 = sphi 0, %s248
      %s263 = sphi 0, %s249
      %s267 = sphi 0, %s267
      %s269 = sphi 0, %s267
      %s270 = sphi 0, %s269
      %s284 = sphi 0, %s270
      %s288 = sphi 0, %s288
      %s290 = sphi 0, %s288
      %s291 = sphi 0, %s290
      %s305 = sphi 0, %s291
      %s309 = sphi 0, %s309
      %s311 = sphi 0, %s309
      %s312 = sphi 0, %s311
      %s326 = sphi 0, %s312
      %s332 = sphi 0, %s334
      %s335 = sphi 0, %s332
      %s336 = sphi 0, %s335
      %s352 = sphi 0, %s336
    $region4: #{tpu_custom_call.1} parent=1 // loop_header_branch
      %26 = sbr.rel (%p24) target = $region8
    $region5: #{tpu_custom_call.1} parent=1 // loop_body
      %s28 = ssub.s32 %s23, 1
      %s29 = ssub.s32 %s23, 2
      %s30 = sadd.s32 %s23, 1
      %s31 = ssub.s32 %s23, %s30
      %p32 = scmp.eq.s32.totalorder %s31, 0
      %s34 = sadd.s32 %s33, 1
      %s35 = scalar_select %p32, %s33, %s34
      %p38 = pneg %p32
      %p39 = scmp.eq.s32.totalorder %s23, 1
      %p40 = por %p38, %p39
      %p41 = scmp.ne.s32.totalorder %s33, %s36
      %p42 = scmp.eq.s32.totalorder %s23, 0
      %p43 = por %p41, %p42
      %p44 = scmp.ne.s32.totalorder %s33, %s36
      %p45 = scmp.eq.s32.totalorder %s28, 1
      %p46 = por %p44, %p45
      %p47 = scmp.ne.s32.totalorder %s36, %s37
      %p48 = scmp.eq.s32.totalorder %s28, 0
      %p49 = por %p47, %p48
      %p50 = scmp.ne.s32.totalorder %s36, %s37
      %p51 = scmp.eq.s32.totalorder %s29, 1
      %p52 = por %p50, %p51
      %p54 = scmp.ne.s32.totalorder %s37, %s53
      %p55 = scmp.eq.s32.totalorder %s29, 0
      %p56 = por %p54, %p55
      %s58 = sadd.s32 %s57, 1
      %p61 = scmp.eq.s32.totalorder %s23, 1
      %p62 = scmp.ne.s32.totalorder %s57, %s59
      %p63 = scmp.eq.s32.totalorder %s23, 0
      %p64 = por %p62, %p63
      %p65 = scmp.ne.s32.totalorder %s57, %s59
      %p66 = scmp.eq.s32.totalorder %s28, 1
      %p67 = por %p65, %p66
      %p68 = scmp.ne.s32.totalorder %s59, %s60
      %p69 = scmp.eq.s32.totalorder %s28, 0
      %p70 = por %p68, %p69
      %p71 = scmp.ne.s32.totalorder %s59, %s60
      %p72 = scmp.eq.s32.totalorder %s29, 1
      %p73 = por %p71, %p72
      %p75 = scmp.ne.s32.totalorder %s60, %s74
      %p76 = scmp.eq.s32.totalorder %s29, 0
      %p77 = por %p75, %p76
      %s79 = sadd.s32 %s78, 1
      %p82 = scmp.eq.s32.totalorder %s23, 1
      %p83 = scmp.ne.s32.totalorder %s78, %s80
      %p84 = scmp.eq.s32.totalorder %s23, 0
      %p85 = por %p83, %p84
      %p86 = scmp.ne.s32.totalorder %s78, %s80
      %p87 = scmp.eq.s32.totalorder %s28, 1
      %p88 = por %p86, %p87
      %p89 = scmp.ne.s32.totalorder %s80, %s81
      %p90 = scmp.eq.s32.totalorder %s28, 0
      %p91 = por %p89, %p90
      %p92 = scmp.ne.s32.totalorder %s80, %s81
      %p93 = scmp.eq.s32.totalorder %s29, 1
      %p94 = por %p92, %p93
      %p96 = scmp.ne.s32.totalorder %s81, %s95
      %p97 = scmp.eq.s32.totalorder %s29, 0
      %p98 = por %p96, %p97
      %s100 = sadd.s32 %s99, 1
      %p103 = scmp.eq.s32.totalorder %s23, 1
      %p104 = scmp.ne.s32.totalorder %s99, %s101
      %p105 = scmp.eq.s32.totalorder %s23, 0
      %p106 = por %p104, %p105
      %p107 = scmp.ne.s32.totalorder %s99, %s101
      %p108 = scmp.eq.s32.totalorder %s28, 1
      %p109 = por %p107, %p108
      %p110 = scmp.ne.s32.totalorder %s101, %s102
      %p111 = scmp.eq.s32.totalorder %s28, 0
      %p112 = por %p110, %p111
      %p113 = scmp.ne.s32.totalorder %s101, %s102
      %p114 = scmp.eq.s32.totalorder %s29, 1
      %p115 = por %p113, %p114
      %p117 = scmp.ne.s32.totalorder %s102, %s116
      %p118 = scmp.eq.s32.totalorder %s29, 0
      %p119 = por %p117, %p118
      %s121 = sadd.s32 %s120, 1
      %p124 = scmp.eq.s32.totalorder %s23, 1
      %p125 = scmp.ne.s32.totalorder %s120, %s122
      %p126 = scmp.eq.s32.totalorder %s23, 0
      %p127 = por %p125, %p126
      %p128 = scmp.ne.s32.totalorder %s120, %s122
      %p129 = scmp.eq.s32.totalorder %s28, 1
      %p130 = por %p128, %p129
      %p131 = scmp.ne.s32.totalorder %s122, %s123
      %p132 = scmp.eq.s32.totalorder %s28, 0
      %p133 = por %p131, %p132
      %p134 = scmp.ne.s32.totalorder %s122, %s123
      %p135 = scmp.eq.s32.totalorder %s29, 1
      %p136 = por %p134, %p135
      %p138 = scmp.ne.s32.totalorder %s123, %s137
      %p139 = scmp.eq.s32.totalorder %s29, 0
      %p140 = por %p138, %p139
      %s142 = sadd.s32 %s141, 1
      %p145 = scmp.eq.s32.totalorder %s23, 1
      %p146 = scmp.ne.s32.totalorder %s141, %s143
      %p147 = scmp.eq.s32.totalorder %s23, 0
      %p148 = por %p146, %p147
      %p149 = scmp.ne.s32.totalorder %s141, %s143
      %p150 = scmp.eq.s32.totalorder %s28, 1
      %p151 = por %p149, %p150
      %p152 = scmp.ne.s32.totalorder %s143, %s144
      %p153 = scmp.eq.s32.totalorder %s28, 0
      %p154 = por %p152, %p153
      %p155 = scmp.ne.s32.totalorder %s143, %s144
      %p156 = scmp.eq.s32.totalorder %s29, 1
      %p157 = por %p155, %p156
      %p159 = scmp.ne.s32.totalorder %s144, %s158
      %p160 = scmp.eq.s32.totalorder %s29, 0
      %p161 = por %p159, %p160
      %s163 = sadd.s32 %s162, 1
      %p166 = scmp.eq.s32.totalorder %s23, 1
      %p167 = scmp.ne.s32.totalorder %s162, %s164
      %p168 = scmp.eq.s32.totalorder %s23, 0
      %p169 = por %p167, %p168
      %p170 = scmp.ne.s32.totalorder %s162, %s164
      %p171 = scmp.eq.s32.totalorder %s28, 1
      %p172 = por %p170, %p171
      %p173 = scmp.ne.s32.totalorder %s164, %s165
      %p174 = scmp.eq.s32.totalorder %s28, 0
      %p175 = por %p173, %p174
      %p176 = scmp.ne.s32.totalorder %s164, %s165
      %p177 = scmp.eq.s32.totalorder %s29, 1
      %p178 = por %p176, %p177
      %p180 = scmp.ne.s32.totalorder %s165, %s179
      %p181 = scmp.eq.s32.totalorder %s29, 0
      %p182 = por %p180, %p181
      %s184 = sadd.s32 %s183, 1
      %p187 = scmp.eq.s32.totalorder %s23, 1
      %p188 = scmp.ne.s32.totalorder %s183, %s185
      %p189 = scmp.eq.s32.totalorder %s23, 0
      %p190 = por %p188, %p189
      %p191 = scmp.ne.s32.totalorder %s183, %s185
      %p192 = scmp.eq.s32.totalorder %s28, 1
      %p193 = por %p191, %p192
      %p194 = scmp.ne.s32.totalorder %s185, %s186
      %p195 = scmp.eq.s32.totalorder %s28, 0
      %p196 = por %p194, %p195
      %p197 = scmp.ne.s32.totalorder %s185, %s186
      %p198 = scmp.eq.s32.totalorder %s29, 1
      %p199 = por %p197, %p198
      %p201 = scmp.ne.s32.totalorder %s186, %s200
      %p202 = scmp.eq.s32.totalorder %s29, 0
      %p203 = por %p201, %p202
      %s205 = sadd.s32 %s204, 1
      %p208 = scmp.eq.s32.totalorder %s23, 1
      %p209 = scmp.ne.s32.totalorder %s204, %s206
      %p210 = scmp.eq.s32.totalorder %s23, 0
      %p211 = por %p209, %p210
      %p212 = scmp.ne.s32.totalorder %s204, %s206
      %p213 = scmp.eq.s32.totalorder %s28, 1
      %p214 = por %p212, %p213
      %p215 = scmp.ne.s32.totalorder %s206, %s207
      %p216 = scmp.eq.s32.totalorder %s28, 0
      %p217 = por %p215, %p216
      %p218 = scmp.ne.s32.totalorder %s206, %s207
      %p219 = scmp.eq.s32.totalorder %s29, 1
      %p220 = por %p218, %p219
      %p222 = scmp.ne.s32.totalorder %s207, %s221
      %p223 = scmp.eq.s32.totalorder %s29, 0
      %p224 = por %p222, %p223
      %s226 = sadd.s32 %s225, 1
      %p229 = scmp.eq.s32.totalorder %s23, 1
      %p230 = scmp.ne.s32.totalorder %s225, %s227
      %p231 = scmp.eq.s32.totalorder %s23, 0
      %p232 = por %p230, %p231
      %p233 = scmp.ne.s32.totalorder %s225, %s227
      %p234 = scmp.eq.s32.totalorder %s28, 1
      %p235 = por %p233, %p234
      %p236 = scmp.ne.s32.totalorder %s227, %s228
      %p237 = scmp.eq.s32.totalorder %s28, 0
      %p238 = por %p236, %p237
      %p239 = scmp.ne.s32.totalorder %s227, %s228
      %p240 = scmp.eq.s32.totalorder %s29, 1
      %p241 = por %p239, %p240
      %p243 = scmp.ne.s32.totalorder %s228, %s242
      %p244 = scmp.eq.s32.totalorder %s29, 0
      %p245 = por %p243, %p244
      %s247 = sadd.s32 %s246, 1
      %p250 = scmp.eq.s32.totalorder %s23, 1
      %p251 = scmp.ne.s32.totalorder %s246, %s248
      %p252 = scmp.eq.s32.totalorder %s23, 0
      %p253 = por %p251, %p252
      %p254 = scmp.ne.s32.totalorder %s246, %s248
      %p255 = scmp.eq.s32.totalorder %s28, 1
      %p256 = por %p254, %p255
      %p257 = scmp.ne.s32.totalorder %s248, %s249
      %p258 = scmp.eq.s32.totalorder %s28, 0
      %p259 = por %p257, %p258
      %p260 = scmp.ne.s32.totalorder %s248, %s249
      %p261 = scmp.eq.s32.totalorder %s29, 1
      %p262 = por %p260, %p261
      %p264 = scmp.ne.s32.totalorder %s249, %s263
      %p265 = scmp.eq.s32.totalorder %s29, 0
      %p266 = por %p264, %p265
      %s268 = sadd.s32 %s267, 1
      %p271 = scmp.eq.s32.totalorder %s23, 1
      %p272 = scmp.ne.s32.totalorder %s267, %s269
      %p273 = scmp.eq.s32.totalorder %s23, 0
      %p274 = por %p272, %p273
      %p275 = scmp.ne.s32.totalorder %s267, %s269
      %p276 = scmp.eq.s32.totalorder %s28, 1
      %p277 = por %p275, %p276
      %p278 = scmp.ne.s32.totalorder %s269, %s270
      %p279 = scmp.eq.s32.totalorder %s28, 0
      %p280 = por %p278, %p279
      %p281 = scmp.ne.s32.totalorder %s269, %s270
      %p282 = scmp.eq.s32.totalorder %s29, 1
      %p283 = por %p281, %p282
      %p285 = scmp.ne.s32.totalorder %s270, %s284
      %p286 = scmp.eq.s32.totalorder %s29, 0
      %p287 = por %p285, %p286
      %s289 = sadd.s32 %s288, 1
      %p292 = scmp.eq.s32.totalorder %s23, 1
      %p293 = scmp.ne.s32.totalorder %s288, %s290
      %p294 = scmp.eq.s32.totalorder %s23, 0
      %p295 = por %p293, %p294
      %p296 = scmp.ne.s32.totalorder %s288, %s290
      %p297 = scmp.eq.s32.totalorder %s28, 1
      %p298 = por %p296, %p297
      %p299 = scmp.ne.s32.totalorder %s290, %s291
      %p300 = scmp.eq.s32.totalorder %s28, 0
      %p301 = por %p299, %p300
      %p302 = scmp.ne.s32.totalorder %s290, %s291
      %p303 = scmp.eq.s32.totalorder %s29, 1
      %p304 = por %p302, %p303
      %p306 = scmp.ne.s32.totalorder %s291, %s305
      %p307 = scmp.eq.s32.totalorder %s29, 0
      %p308 = por %p306, %p307
      %s310 = sadd.s32 %s309, 1
      %p313 = scmp.eq.s32.totalorder %s23, 1
      %p314 = scmp.ne.s32.totalorder %s309, %s311
      %p315 = scmp.eq.s32.totalorder %s23, 0
      %p316 = por %p314, %p315
      %p317 = scmp.ne.s32.totalorder %s309, %s311
      %p318 = scmp.eq.s32.totalorder %s28, 1
      %p319 = por %p317, %p318
      %p320 = scmp.ne.s32.totalorder %s311, %s312
      %p321 = scmp.eq.s32.totalorder %s28, 0
      %p322 = por %p320, %p321
      %p323 = scmp.ne.s32.totalorder %s311, %s312
      %p324 = scmp.eq.s32.totalorder %s29, 1
      %p325 = por %p323, %p324
      %p327 = scmp.ne.s32.totalorder %s312, %s326
      %p328 = scmp.eq.s32.totalorder %s29, 0
      %p329 = por %p327, %p328
      %s330 = ssub.s32 %s23, %s30
      %p331 = scmp.eq.s32.totalorder %s330, 0
      %s333 = sadd.s32 %s332, 1
      %s334 = scalar_select %p331, %s332, %s333
      %p337 = pneg %p331
      %p338 = scmp.eq.s32.totalorder %s23, 1
      %p339 = por %p337, %p338
      %p340 = scmp.ne.s32.totalorder %s332, %s335
      %p341 = scmp.eq.s32.totalorder %s23, 0
      %p342 = por %p340, %p341
      %p343 = scmp.ne.s32.totalorder %s332, %s335
      %p344 = scmp.eq.s32.totalorder %s28, 1
      %p345 = por %p343, %p344
      %p346 = scmp.ne.s32.totalorder %s335, %s336
      %p347 = scmp.eq.s32.totalorder %s28, 0
      %p348 = por %p346, %p347
      %p349 = scmp.ne.s32.totalorder %s335, %s336
      %p350 = scmp.eq.s32.totalorder %s29, 1
      %p351 = por %p349, %p350
      %p353 = scmp.ne.s32.totalorder %s336, %s352
      %p354 = scmp.eq.s32.totalorder %s29, 0
      %p355 = por %p353, %p354
      %p356 = scmp.le.s32.totalorder 1, %s23
      %p357 = scmp.lt.s32.totalorder %s23, 3
      %p358 = pnand %p356, %p357
      %p359 = pneg %p358
      // Predicated region
      $region9: #{tpu_custom_call.1} parent=5 // pred_check
        _
      $region10: #{tpu_custom_call.1} parent=5 // pred_check_branch
        %361 = sbr.rel (%p358) target = $region12
      $region11: #{tpu_custom_call.1} parent=5 // pred_region
        %s362 = ssub.s32 %s23, 1
        // Predicated region
        $region13: #{tpu_custom_call.1} parent=11 // pred_check
          %p363 = pneg %p70
        $region14: #{tpu_custom_call.1} parent=11 // pred_check_branch
          %365 = sbr.rel (%p363) target = $region16
        $region15: #{tpu_custom_call.1} parent=11 // pred_region
          _
        $region16: #{tpu_custom_call.1} parent=11 // pred_fallthru
          _
        // Predicated region
        $region17: #{tpu_custom_call.1} parent=11 // pred_check
          %p366 = pneg %p91
        $region18: #{tpu_custom_call.1} parent=11 // pred_check_branch
          %368 = sbr.rel (%p366) target = $region20
        $region19: #{tpu_custom_call.1} parent=11 // pred_region
          _
        $region20: #{tpu_custom_call.1} parent=11 // pred_fallthru
          _
        // Predicated region
        $region21: #{tpu_custom_call.1} parent=11 // pred_check
          %p369 = pneg %p112
        $region22: #{tpu_custom_call.1} parent=11 // pred_check_branch
          %371 = sbr.rel (%p369) target = $region24
        $region23: #{tpu_custom_call.1} parent=11 // pred_region
          _
        $region24: #{tpu_custom_call.1} parent=11 // pred_fallthru
          _
        // Predicated region
        $region25: #{tpu_custom_call.1} parent=11 // pred_check
          %p372 = pneg %p133
        $region26: #{tpu_custom_call.1} parent=11 // pred_check_branch
          %374 = sbr.rel (%p372) target = $region28
        $region27: #{tpu_custom_call.1} parent=11 // pred_region
          _
        $region28: #{tpu_custom_call.1} parent=11 // pred_fallthru
          _
        // Predicated region
        $region29: #{tpu_custom_call.1} parent=11 // pred_check
          %p375 = pneg %p154
        $region30: #{tpu_custom_call.1} parent=11 // pred_check_branch
          %377 = sbr.rel (%p375) target = $region32
        $region31: #{tpu_custom_call.1} parent=11 // pred_region
          _
        $region32: #{tpu_custom_call.1} parent=11 // pred_fallthru
          _
        // Predicated region
        $region33: #{tpu_custom_call.1} parent=11 // pred_check
          %p378 = pneg %p175
        $region34: #{tpu_custom_call.1} parent=11 // pred_check_branch
          %380 = sbr.rel (%p378) target = $region36
        $region35: #{tpu_custom_call.1} parent=11 // pred_region
          _
        $region36: #{tpu_custom_call.1} parent=11 // pred_fallthru
          _
        // Predicated region
        $region37: #{tpu_custom_call.1} parent=11 // pred_check
          %p381 = pneg %p196
        $region38: #{tpu_custom_call.1} parent=11 // pred_check_branch
          %383 = sbr.rel (%p381) target = $region40
        $region39: #{tpu_custom_call.1} parent=11 // pred_region
          _
        $region40: #{tpu_custom_call.1} parent=11 // pred_fallthru
          _
        // Predicated region
        $region41: #{tpu_custom_call.1} parent=11 // pred_check
          %p384 = pneg %p217
        $region42: #{tpu_custom_call.1} parent=11 // pred_check_branch
          %386 = sbr.rel (%p384) target = $region44
        $region43: #{tpu_custom_call.1} parent=11 // pred_region
          _
        $region44: #{tpu_custom_call.1} parent=11 // pred_fallthru
          _
        // Predicated region
        $region45: #{tpu_custom_call.1} parent=11 // pred_check
          %p387 = pneg %p238
        $region46: #{tpu_custom_call.1} parent=11 // pred_check_branch
          %389 = sbr.rel (%p387) target = $region48
        $region47: #{tpu_custom_call.1} parent=11 // pred_region
          _
        $region48: #{tpu_custom_call.1} parent=11 // pred_fallthru
          _
        // Predicated region
        $region49: #{tpu_custom_call.1} parent=11 // pred_check
          %p390 = pneg %p259
        $region50: #{tpu_custom_call.1} parent=11 // pred_check_branch
          %392 = sbr.rel (%p390) target = $region52
        $region51: #{tpu_custom_call.1} parent=11 // pred_region
          _
        $region52: #{tpu_custom_call.1} parent=11 // pred_fallthru
          _
        // Predicated region
        $region53: #{tpu_custom_call.1} parent=11 // pred_check
          %p393 = pneg %p280
        $region54: #{tpu_custom_call.1} parent=11 // pred_check_branch
          %395 = sbr.rel (%p393) target = $region56
        $region55: #{tpu_custom_call.1} parent=11 // pred_region
          _
        $region56: #{tpu_custom_call.1} parent=11 // pred_fallthru
          _
        // Predicated region
        $region57: #{tpu_custom_call.1} parent=11 // pred_check
          %p396 = pneg %p301
        $region58: #{tpu_custom_call.1} parent=11 // pred_check_branch
          %398 = sbr.rel (%p396) target = $region60
        $region59: #{tpu_custom_call.1} parent=11 // pred_region
          _
        $region60: #{tpu_custom_call.1} parent=11 // pred_fallthru
          _
        // Predicated region
        $region61: #{tpu_custom_call.1} parent=11 // pred_check
          %p399 = pneg %p322
        $region62: #{tpu_custom_call.1} parent=11 // pred_check_branch
          %401 = sbr.rel (%p399) target = $region64
        $region63: #{tpu_custom_call.1} parent=11 // pred_region
          _
        $region64: #{tpu_custom_call.1} parent=11 // pred_fallthru
          _
      $region12: #{tpu_custom_call.1} parent=5 // pred_fallthru
        _
      %p402 = scmp.lt.s32.totalorder %s23, 2
      // Predicated region
      $region65: #{tpu_custom_call.1} parent=5 // pred_check
        %p403 = pneg %p402
      $region66: #{tpu_custom_call.1} parent=5 // pred_check_branch
        %405 = sbr.rel (%p403) target = $region68
      $region67: #{tpu_custom_call.1} parent=5 // pred_region
        // Predicated region
        $region69: #{tpu_custom_call.1} parent=67 // pred_check
          %p406 = pneg %p43
        $region70: #{tpu_custom_call.1} parent=67 // pred_check_branch
          %408 = sbr.rel (%p406) target = $region72
        $region71: #{tpu_custom_call.1} parent=67 // pred_region
          %p409 = scmp.lt.s32.totalorder %s23, 1
          %s410 = scalar_select %p409, %s23, 1
          %s411 = smul.addr %s410, 4
          %s412 = smul.addr %s411, 4
          %s413 = scalar_lea.vmem %s0, %s412
        $region72: #{tpu_custom_call.1} parent=67 // pred_fallthru
          _
      $region68: #{tpu_custom_call.1} parent=5 // pred_fallthru
        _
      %p414 = scmp.le.s32.totalorder 1, %s23
      %p415 = scmp.lt.s32.totalorder %s23, 3
      %p416 = pnand %p414, %p415
      %p417 = pneg %p416
      // Predicated region
      $region73: #{tpu_custom_call.1} parent=5 // pred_check
        _
      $region74: #{tpu_custom_call.1} parent=5 // pred_check_branch
        %419 = sbr.rel (%p416) target = $region76
      $region75: #{tpu_custom_call.1} parent=5 // pred_region
        %s420 = ssub.s32 %s23, 1
        %p421 = scmp.lt.s32.totalorder %s28, 1
        %s422 = scalar_select %p421, %s28, 1
        %s423 = smul.addr %s422, 4
        %s424 = smul.addr %s423, 4
        %s425 = scalar_lea.vmem %s0, %s424
        %p426 = pneg %p49
        %p427 = pneg %p46
        %p428 = pneg %p70
        %p429 = pneg %p67
        %p430 = pneg %p91
        %p431 = pneg %p88
        %p432 = pneg %p112
        %p433 = pneg %p109
        %p434 = pneg %p133
        %p435 = pneg %p130
        %p436 = pneg %p154
        %p437 = pneg %p151
        %p438 = pneg %p175
        %p439 = pneg %p172
        %p440 = pneg %p196
        %p441 = pneg %p193
        %p442 = pneg %p217
        %p443 = pneg %p214
        %p444 = pneg %p238
        %p445 = pneg %p235
        %p446 = pneg %p259
        %p447 = pneg %p256
        %p448 = pneg %p280
        %p449 = pneg %p277
        %p450 = pneg %p301
        %p451 = pneg %p298
        %p452 = pneg %p322
        %p453 = pneg %p319
        %p454 = pneg %p348
        %p455 = pneg %p345
        %s456 = sand.u32 %s335, 1
        %s457 = scalar_lea.sflag [#allocation3], %s456
        %s458 = sand.u32 %s335, 1
        %s459 = smul.addr %s458, 12
        %s460 = scalar_lea.vmem [#allocation2], %s459
        %p461 = scmp.lt.s32.totalorder %s28, 1
        %s462 = scalar_select %p461, %s28, 1
        %s463 = smul.addr %s462, 4
        %s464 = smul.addr %s463, 4
        %s465 = scalar_lea.vmem %s0, %s464
        %v467 = vld [vmem:[%s2] sm:$0xf]
        %v468 = vld [vmem:[%s465] sm:$0xff]
        %v469 = vld [vmem:[%s465 + $0x8] sm:$0xf]
        %471 = vset.pattern.permute.xlu0 0
        %472 = vperm.xlu0 %471, %v467
        %v473 = vpop.permute.xlu0 %472
        %v476 = vcombine.high %v468, %v468
        %v478 = vmul.f32 %v473, %v468
        %v479 = vmul.f32 %v473, %v476
        %v480 = vmul.f32 %v473, %v469
        %v481 = vadd.f32 %v478, 0.0
        %v482 = vadd.f32 %v479, 0.0
        %v483 = vadd.f32 %v480, 0.0
        %v484 = vld [vmem:[%s465] sm:$0xff]
        %v485 = vld [vmem:[%s465 + $0x8] sm:$0xf]
        %486 = vset.pattern.permute.xlu0 1
        %487 = vperm.xlu0 %486, %v467
        %v488 = vpop.permute.xlu0 %487
        %v492 = vcombine.high %v484, %v484
        %493 = vrot.lane.b32.xlu0 %v484, 127
        %v494 = vpop.permute.xlu0 %493
        %495 = vrot.lane.b32.xlu0 %v492, 127
        %v496 = vpop.permute.xlu0 %495
        %497 = vrot.lane.b32.xlu0 %v485, 127
        %v498 = vpop.permute.xlu0 %497
        %vm499 = vcmask 1039360
        %v500 = vsel %vm499, %v494, %v496
        %v501 = vsel %vm499, %v496, %v498
        %v505 = vmul.f32 %v488, %v500
        %v506 = vmul.f32 %v488, %v501
        %v507 = vmul.f32 %v488, %v498
        %v508 = vadd.f32 %v481, %v505
        %v509 = vadd.f32 %v482, %v506
        %v510 = vadd.f32 %v483, %v507
        %v511 = vld [vmem:[%s465] sm:$0xff]
        %v512 = vld [vmem:[%s465 + $0x8] sm:$0xf]
        %513 = vset.pattern.permute.xlu0 2
        %514 = vperm.xlu0 %513, %v467
        %v515 = vpop.permute.xlu0 %514
        %v519 = vcombine.high %v511, %v511
        %520 = vrot.lane.b32.xlu0 %v511, 126
        %v521 = vpop.permute.xlu0 %520
        %522 = vrot.lane.b32.xlu0 %v519, 126
        %v523 = vpop.permute.xlu0 %522
        %524 = vrot.lane.b32.xlu0 %v512, 126
        %v525 = vpop.permute.xlu0 %524
        %vm526 = vcmask 1031168
        %v527 = vsel %vm526, %v521, %v523
        %v528 = vsel %vm526, %v523, %v525
        %v532 = vmul.f32 %v515, %v527
        %v533 = vmul.f32 %v515, %v528
        %v534 = vmul.f32 %v515, %v525
        %v535 = vadd.f32 %v508, %v532
        %v536 = vadd.f32 %v509, %v533
        %v537 = vadd.f32 %v510, %v534
        %v538 = vld [vmem:[%s465] sm:$0xff]
        %v539 = vld [vmem:[%s465 + $0x8] sm:$0xf]
        %540 = vset.pattern.permute.xlu0 3
        %541 = vperm.xlu0 %540, %v467
        %v542 = vpop.permute.xlu0 %541
        %v546 = vcombine.high %v538, %v538
        %547 = vrot.lane.b32.xlu0 %v538, 125
        %v548 = vpop.permute.xlu0 %547
        %549 = vrot.lane.b32.xlu0 %v546, 125
        %v550 = vpop.permute.xlu0 %549
        %551 = vrot.lane.b32.xlu0 %v539, 125
        %v552 = vpop.permute.xlu0 %551
        %vm553 = vcmask 1022976
        %v554 = vsel %vm553, %v548, %v550
        %v555 = vsel %vm553, %v550, %v552
        %v559 = vmul.f32 %v542, %v554
        %v560 = vmul.f32 %v542, %v555
        %v561 = vmul.f32 %v542, %v552
        %v562 = vadd.f32 %v535, %v559
        %v563 = vadd.f32 %v536, %v560
        %v564 = vadd.f32 %v537, %v561
        %v565 = vld [vmem:[%s465] sm:$0xff]
        %v566 = vld [vmem:[%s465 + $0x8] sm:$0xf]
        %567 = vset.pattern.permute.xlu0 4
        %568 = vperm.xlu0 %567, %v467
        %v569 = vpop.permute.xlu0 %568
        %v573 = vcombine.high %v565, %v565
        %574 = vrot.lane.b32.xlu0 %v565, 124
        %v575 = vpop.permute.xlu0 %574
        %576 = vrot.lane.b32.xlu0 %v573, 124
        %v577 = vpop.permute.xlu0 %576
        %578 = vrot.lane.b32.xlu0 %v566, 124
        %v579 = vpop.permute.xlu0 %578
        %vm580 = vcmask 1014784
        %v581 = vsel %vm580, %v575, %v577
        %v582 = vsel %vm580, %v577, %v579
        %v586 = vmul.f32 %v569, %v581
        %v587 = vmul.f32 %v569, %v582
        %v588 = vmul.f32 %v569, %v579
        %v589 = vadd.f32 %v562, %v586
        %v590 = vadd.f32 %v563, %v587
        %v591 = vadd.f32 %v564, %v588
        %v592 = vld [vmem:[%s465] sm:$0xff]
        %v593 = vld [vmem:[%s465 + $0x8] sm:$0xf]
        %594 = vset.pattern.permute.xlu0 5
        %595 = vperm.xlu0 %594, %v467
        %v596 = vpop.permute.xlu0 %595
        %v600 = vcombine.high %v592, %v592
        %601 = vrot.lane.b32.xlu0 %v592, 108
        %v602 = vpop.permute.xlu0 %601
        %603 = vrot.lane.b32.xlu0 %v600, 108
        %v604 = vpop.permute.xlu0 %603
        %605 = vrot.lane.b32.xlu0 %v593, 108
        %v606 = vpop.permute.xlu0 %605
        %vm607 = vcmask 883712
        %v608 = vsel %vm607, %v602, %v604
        %v609 = vsel %vm607, %v604, %v606
        %v613 = vmul.f32 %v596, %v608
        %v614 = vmul.f32 %v596, %v609
        %v615 = vmul.f32 %v596, %v606
        %v616 = vadd.f32 %v589, %v613
        %v617 = vadd.f32 %v590, %v614
        %v618 = vadd.f32 %v591, %v615
        %v619 = vld [vmem:[%s465] sm:$0xff]
        %v620 = vld [vmem:[%s465 + $0x8] sm:$0xf]
        %621 = vset.pattern.permute.xlu0 6
        %622 = vperm.xlu0 %621, %v467
        %v623 = vpop.permute.xlu0 %622
        %v627 = vcombine.high %v619, %v619
        %628 = vrot.lane.b32.xlu0 %v619, 107
        %v629 = vpop.permute.xlu0 %628
        %630 = vrot.lane.b32.xlu0 %v627, 107
        %v631 = vpop.permute.xlu0 %630
        %632 = vrot.lane.b32.xlu0 %v620, 107
        %v633 = vpop.permute.xlu0 %632
        %vm634 = vcmask 875520
        %v635 = vsel %vm634, %v629, %v631
        %v636 = vsel %vm634, %v631, %v633
        %v640 = vmul.f32 %v623, %v635
        %v641 = vmul.f32 %v623, %v636
        %v642 = vmul.f32 %v623, %v633
        %v643 = vadd.f32 %v616, %v640
        %v644 = vadd.f32 %v617, %v641
        %v645 = vadd.f32 %v618, %v642
        %v646 = vld [vmem:[%s465] sm:$0xff]
        %v647 = vld [vmem:[%s465 + $0x8] sm:$0xf]
        %648 = vset.pattern.permute.xlu0 7
        %649 = vperm.xlu0 %648, %v467
        %v650 = vpop.permute.xlu0 %649
        %v654 = vcombine.high %v646, %v646
        %655 = vrot.lane.b32.xlu0 %v646, 106
        %v656 = vpop.permute.xlu0 %655
        %657 = vrot.lane.b32.xlu0 %v654, 106
        %v658 = vpop.permute.xlu0 %657
        %659 = vrot.lane.b32.xlu0 %v647, 106
        %v660 = vpop.permute.xlu0 %659
        %vm661 = vcmask 867328
        %v662 = vsel %vm661, %v656, %v658
        %v663 = vsel %vm661, %v658, %v660
        %v667 = vmul.f32 %v650, %v662
        %v668 = vmul.f32 %v650, %v663
        %v669 = vmul.f32 %v650, %v660
        %v670 = vadd.f32 %v643, %v667
        %v671 = vadd.f32 %v644, %v668
        %v672 = vadd.f32 %v645, %v669
        %v673 = vld [vmem:[%s465] sm:$0xff]
        %v674 = vld [vmem:[%s465 + $0x8] sm:$0xf]
        %675 = vset.pattern.permute.xlu0 8
        %676 = vperm.xlu0 %675, %v467
        %v677 = vpop.permute.xlu0 %676
        %v681 = vcombine.high %v673, %v673
        %682 = vrot.lane.b32.xlu0 %v673, 105
        %v683 = vpop.permute.xlu0 %682
        %684 = vrot.lane.b32.xlu0 %v681, 105
        %v685 = vpop.permute.xlu0 %684
        %686 = vrot.lane.b32.xlu0 %v674, 105
        %v687 = vpop.permute.xlu0 %686
        %vm688 = vcmask 859136
        %v689 = vsel %vm688, %v683, %v685
        %v690 = vsel %vm688, %v685, %v687
        %v694 = vmul.f32 %v677, %v689
        %v695 = vmul.f32 %v677, %v690
        %v696 = vmul.f32 %v677, %v687
        %v697 = vadd.f32 %v670, %v694
        %v698 = vadd.f32 %v671, %v695
        %v699 = vadd.f32 %v672, %v696
        %v700 = vld [vmem:[%s465] sm:$0xff]
        %v701 = vld [vmem:[%s465 + $0x8] sm:$0xf]
        %702 = vset.pattern.permute.xlu0 9
        %703 = vperm.xlu0 %702, %v467
        %v704 = vpop.permute.xlu0 %703
        %v708 = vcombine.high %v700, %v700
        %709 = vrot.lane.b32.xlu0 %v700, 104
        %v710 = vpop.permute.xlu0 %709
        %711 = vrot.lane.b32.xlu0 %v708, 104
        %v712 = vpop.permute.xlu0 %711
        %713 = vrot.lane.b32.xlu0 %v701, 104
        %v714 = vpop.permute.xlu0 %713
        %vm715 = vcmask 850944
        %v716 = vsel %vm715, %v710, %v712
        %v717 = vsel %vm715, %v712, %v714
        %v721 = vmul.f32 %v704, %v716
        %v722 = vmul.f32 %v704, %v717
        %v723 = vmul.f32 %v704, %v714
        %v724 = vadd.f32 %v697, %v721
        %v725 = vadd.f32 %v698, %v722
        %v726 = vadd.f32 %v699, %v723
        %v727 = vld [vmem:[%s465] sm:$0xff]
        %v728 = vld [vmem:[%s465 + $0x8] sm:$0xf]
        %729 = vset.pattern.permute.xlu0 10
        %730 = vperm.xlu0 %729, %v467
        %v731 = vpop.permute.xlu0 %730
        %v735 = vcombine.high %v727, %v727
        %736 = vrot.lane.b32.xlu0 %v727, 88
        %v737 = vpop.permute.xlu0 %736
        %738 = vrot.lane.b32.xlu0 %v735, 88
        %v739 = vpop.permute.xlu0 %738
        %740 = vrot.lane.b32.xlu0 %v728, 88
        %v741 = vpop.permute.xlu0 %740
        %vm742 = vcmask 719872
        %v743 = vsel %vm742, %v737, %v739
        %v744 = vsel %vm742, %v739, %v741
        %v748 = vmul.f32 %v731, %v743
        %v749 = vmul.f32 %v731, %v744
        %v750 = vmul.f32 %v731, %v741
        %v751 = vadd.f32 %v724, %v748
        %v752 = vadd.f32 %v725, %v749
        %v753 = vadd.f32 %v726, %v750
        %v754 = vld [vmem:[%s465] sm:$0xff]
        %v755 = vld [vmem:[%s465 + $0x8] sm:$0xf]
        %756 = vset.pattern.permute.xlu0 11
        %757 = vperm.xlu0 %756, %v467
        %v758 = vpop.permute.xlu0 %757
        %v762 = vcombine.high %v754, %v754
        %763 = vrot.lane.b32.xlu0 %v754, 87
        %v764 = vpop.permute.xlu0 %763
        %765 = vrot.lane.b32.xlu0 %v762, 87
        %v766 = vpop.permute.xlu0 %765
        %767 = vrot.lane.b32.xlu0 %v755, 87
        %v768 = vpop.permute.xlu0 %767
        %vm769 = vcmask 711680
        %v770 = vsel %vm769, %v764, %v766
        %v771 = vsel %vm769, %v766, %v768
        %v775 = vmul.f32 %v758, %v770
        %v776 = vmul.f32 %v758, %v771
        %v777 = vmul.f32 %v758, %v768
        %v778 = vadd.f32 %v751, %v775
        %v779 = vadd.f32 %v752, %v776
        %v780 = vadd.f32 %v753, %v777
        %v781 = vld [vmem:[%s465] sm:$0xff]
        %v782 = vld [vmem:[%s465 + $0x8] sm:$0xf]
        %783 = vset.pattern.permute.xlu0 12
        %784 = vperm.xlu0 %783, %v467
        %v785 = vpop.permute.xlu0 %784
        %v789 = vcombine.high %v781, %v781
        %790 = vrot.lane.b32.xlu0 %v781, 86
        %v791 = vpop.permute.xlu0 %790
        %792 = vrot.lane.b32.xlu0 %v789, 86
        %v793 = vpop.permute.xlu0 %792
        %794 = vrot.lane.b32.xlu0 %v782, 86
        %v795 = vpop.permute.xlu0 %794
        %vm796 = vcmask 703488
        %v797 = vsel %vm796, %v791, %v793
        %v798 = vsel %vm796, %v793, %v795
        %v802 = vmul.f32 %v785, %v797
        %v803 = vmul.f32 %v785, %v798
        %v804 = vmul.f32 %v785, %v795
        %v805 = vadd.f32 %v778, %v802
        %v806 = vadd.f32 %v779, %v803
        %v807 = vadd.f32 %v780, %v804
        %v808 = vld [vmem:[%s465] sm:$0xff]
        %v809 = vld [vmem:[%s465 + $0x8] sm:$0xf]
        %810 = vset.pattern.permute.xlu0 13
        %811 = vperm.xlu0 %810, %v467
        %v812 = vpop.permute.xlu0 %811
        %v816 = vcombine.high %v808, %v808
        %817 = vrot.lane.b32.xlu0 %v808, 85
        %v818 = vpop.permute.xlu0 %817
        %819 = vrot.lane.b32.xlu0 %v816, 85
        %v820 = vpop.permute.xlu0 %819
        %821 = vrot.lane.b32.xlu0 %v809, 85
        %v822 = vpop.permute.xlu0 %821
        %vm823 = vcmask 695296
        %v824 = vsel %vm823, %v818, %v820
        %v825 = vsel %vm823, %v820, %v822
        %v829 = vmul.f32 %v812, %v824
        %v830 = vmul.f32 %v812, %v825
        %v831 = vmul.f32 %v812, %v822
        %v832 = vadd.f32 %v805, %v829
        %v833 = vadd.f32 %v806, %v830
        %v834 = vadd.f32 %v807, %v831
        %v835 = vld [vmem:[%s465] sm:$0xff]
        %v836 = vld [vmem:[%s465 + $0x8] sm:$0xf]
        %837 = vset.pattern.permute.xlu0 14
        %838 = vperm.xlu0 %837, %v467
        %v839 = vpop.permute.xlu0 %838
        %v843 = vcombine.high %v835, %v835
        %844 = vrot.lane.b32.xlu0 %v835, 84
        %v845 = vpop.permute.xlu0 %844
        %846 = vrot.lane.b32.xlu0 %v843, 84
        %v847 = vpop.permute.xlu0 %846
        %848 = vrot.lane.b32.xlu0 %v836, 84
        %v849 = vpop.permute.xlu0 %848
        %vm850 = vcmask 687104
        %v851 = vsel %vm850, %v845, %v847
        %v852 = vsel %vm850, %v847, %v849
        %v856 = vmul.f32 %v839, %v851
        %v857 = vmul.f32 %v839, %v852
        %v858 = vmul.f32 %v839, %v849
        %v859 = vadd.f32 %v832, %v856
        %v860 = vadd.f32 %v833, %v857
        %v861 = vadd.f32 %v834, %v858
        %v862 = vld [vmem:[%s465] sm:$0xff]
        %v863 = vld [vmem:[%s465 + $0x8] sm:$0xf]
        %864 = vset.pattern.permute.xlu0 15
        %865 = vperm.xlu0 %864, %v467
        %v866 = vpop.permute.xlu0 %865
        %v870 = vcombine.high %v862, %v862
        %871 = vrot.lane.b32.xlu0 %v862, 68
        %v872 = vpop.permute.xlu0 %871
        %873 = vrot.lane.b32.xlu0 %v870, 68
        %v874 = vpop.permute.xlu0 %873
        %875 = vrot.lane.b32.xlu0 %v863, 68
        %v876 = vpop.permute.xlu0 %875
        %vm877 = vcmask 556032
        %v878 = vsel %vm877, %v872, %v874
        %v879 = vsel %vm877, %v874, %v876
        %v883 = vmul.f32 %v866, %v878
        %v884 = vmul.f32 %v866, %v879
        %v885 = vmul.f32 %v866, %v876
        %v886 = vadd.f32 %v859, %v883
        %v887 = vadd.f32 %v860, %v884
        %v888 = vadd.f32 %v861, %v885
        %v889 = vld [vmem:[%s465] sm:$0xff]
        %v890 = vld [vmem:[%s465 + $0x8] sm:$0xf]
        %891 = vset.pattern.permute.xlu0 16
        %892 = vperm.xlu0 %891, %v467
        %v893 = vpop.permute.xlu0 %892
        %v897 = vcombine.high %v889, %v889
        %898 = vrot.lane.b32.xlu0 %v889, 67
        %v899 = vpop.permute.xlu0 %898
        %900 = vrot.lane.b32.xlu0 %v897, 67
        %v901 = vpop.permute.xlu0 %900
        %902 = vrot.lane.b32.xlu0 %v890, 67
        %v903 = vpop.permute.xlu0 %902
        %vm904 = vcmask 547840
        %v905 = vsel %vm904, %v899, %v901
        %v906 = vsel %vm904, %v901, %v903
        %v910 = vmul.f32 %v893, %v905
        %v911 = vmul.f32 %v893, %v906
        %v912 = vmul.f32 %v893, %v903
        %v913 = vadd.f32 %v886, %v910
        %v914 = vadd.f32 %v887, %v911
        %v915 = vadd.f32 %v888, %v912
        %v916 = vld [vmem:[%s465] sm:$0xff]
        %v917 = vld [vmem:[%s465 + $0x8] sm:$0xf]
        %918 = vset.pattern.permute.xlu0 17
        %919 = vperm.xlu0 %918, %v467
        %v920 = vpop.permute.xlu0 %919
        %v924 = vcombine.high %v916, %v916
        %925 = vrot.lane.b32.xlu0 %v916, 66
        %v926 = vpop.permute.xlu0 %925
        %927 = vrot.lane.b32.xlu0 %v924, 66
        %v928 = vpop.permute.xlu0 %927
        %929 = vrot.lane.b32.xlu0 %v917, 66
        %v930 = vpop.permute.xlu0 %929
        %vm931 = vcmask 539648
        %v932 = vsel %vm931, %v926, %v928
        %v933 = vsel %vm931, %v928, %v930
        %v937 = vmul.f32 %v920, %v932
        %v938 = vmul.f32 %v920, %v933
        %v939 = vmul.f32 %v920, %v930
        %v940 = vadd.f32 %v913, %v937
        %v941 = vadd.f32 %v914, %v938
        %v942 = vadd.f32 %v915, %v939
        %v943 = vld [vmem:[%s465] sm:$0xff]
        %v944 = vld [vmem:[%s465 + $0x8] sm:$0xf]
        %945 = vset.pattern.permute.xlu0 18
        %946 = vperm.xlu0 %945, %v467
        %v947 = vpop.permute.xlu0 %946
        %v951 = vcombine.high %v943, %v943
        %952 = vrot.lane.b32.xlu0 %v943, 65
        %v953 = vpop.permute.xlu0 %952
        %954 = vrot.lane.b32.xlu0 %v951, 65
        %v955 = vpop.permute.xlu0 %954
        %956 = vrot.lane.b32.xlu0 %v944, 65
        %v957 = vpop.permute.xlu0 %956
        %vm958 = vcmask 531456
        %v959 = vsel %vm958, %v953, %v955
        %v960 = vsel %vm958, %v955, %v957
        %v964 = vmul.f32 %v947, %v959
        %v965 = vmul.f32 %v947, %v960
        %v966 = vmul.f32 %v947, %v957
        %v967 = vadd.f32 %v940, %v964
        %v968 = vadd.f32 %v941, %v965
        %v969 = vadd.f32 %v942, %v966
        %v970 = vld [vmem:[%s465] sm:$0xff]
        %v971 = vld [vmem:[%s465 + $0x8] sm:$0xf]
        %972 = vset.pattern.permute.xlu0 19
        %973 = vperm.xlu0 %972, %v467
        %v974 = vpop.permute.xlu0 %973
        %v978 = vcombine.high %v970, %v970
        %979 = vrot.lane.b32.xlu0 %v970, 64
        %v980 = vpop.permute.xlu0 %979
        %981 = vrot.lane.b32.xlu0 %v978, 64
        %v982 = vpop.permute.xlu0 %981
        %983 = vrot.lane.b32.xlu0 %v971, 64
        %v984 = vpop.permute.xlu0 %983
        %vm985 = vcmask 523264
        %v986 = vsel %vm985, %v980, %v982
        %v987 = vsel %vm985, %v982, %v984
        %v991 = vmul.f32 %v974, %v986
        %v992 = vmul.f32 %v974, %v987
        %v993 = vmul.f32 %v974, %v984
        %v994 = vadd.f32 %v967, %v991
        %v995 = vadd.f32 %v968, %v992
        %v996 = vadd.f32 %v969, %v993
        %v997 = vld [vmem:[%s465] sm:$0xff]
        %v998 = vld [vmem:[%s465 + $0x8] sm:$0xff]
        %999 = vset.pattern.permute.xlu0 20
        %1000 = vperm.xlu0 %999, %v467
        %v1001 = vpop.permute.xlu0 %1000
        %v1005 = vcombine.high %v997, %v997
        %v1006 = vcombine.high %v998, %v998
        %1007 = vrot.lane.b32.xlu0 %v997, 48
        %v1008 = vpop.permute.xlu0 %1007
        %1009 = vrot.lane.b32.xlu0 %v1005, 48
        %v1010 = vpop.permute.xlu0 %1009
        %1011 = vrot.lane.b32.xlu0 %v998, 48
        %v1012 = vpop.permute.xlu0 %1011
        %1013 = vrot.lane.b32.xlu0 %v1006, 48
        %v1014 = vpop.permute.xlu0 %1013
        %vm1015 = vcmask 392192
        %v1016 = vsel %vm1015, %v1008, %v1010
        %v1017 = vsel %vm1015, %v1010, %v1012
        %v1018 = vsel %vm1015, %v1012, %v1014
        %v1022 = vmul.f32 %v1001, %v1016
        %v1023 = vmul.f32 %v1001, %v1017
        %v1024 = vmul.f32 %v1001, %v1018
        %v1025 = vadd.f32 %v994, %v1022
        %v1026 = vadd.f32 %v995, %v1023
        %v1027 = vadd.f32 %v996, %v1024
        %v1028 = vld [vmem:[%s465] sm:$0xff]
        %v1029 = vld [vmem:[%s465 + $0x8] sm:$0xff]
        %1030 = vset.pattern.permute.xlu0 21
        %1031 = vperm.xlu0 %1030, %v467
        %v1032 = vpop.permute.xlu0 %1031
        %v1036 = vcombine.high %v1028, %v1028
        %v1037 = vcombine.high %v1029, %v1029
        %1038 = vrot.lane.b32.xlu0 %v1028, 47
        %v1039 = vpop.permute.xlu0 %1038
        %1040 = vrot.lane.b32.xlu0 %v1036, 47
        %v1041 = vpop.permute.xlu0 %1040
        %1042 = vrot.lane.b32.xlu0 %v1029, 47
        %v1043 = vpop.permute.xlu0 %1042
        %1044 = vrot.lane.b32.xlu0 %v1037, 47
        %v1045 = vpop.permute.xlu0 %1044
        %vm1046 = vcmask 384000
        %v1047 = vsel %vm1046, %v1039, %v1041
        %v1048 = vsel %vm1046, %v1041, %v1043
        %v1049 = vsel %vm1046, %v1043, %v1045
        %v1053 = vmul.f32 %v1032, %v1047
        %v1054 = vmul.f32 %v1032, %v1048
        %v1055 = vmul.f32 %v1032, %v1049
        %v1056 = vadd.f32 %v1025, %v1053
        %v1057 = vadd.f32 %v1026, %v1054
        %v1058 = vadd.f32 %v1027, %v1055
        %v1059 = vld [vmem:[%s465] sm:$0xff]
        %v1060 = vld [vmem:[%s465 + $0x8] sm:$0xff]
        %1061 = vset.pattern.permute.xlu0 22
        %1062 = vperm.xlu0 %1061, %v467
        %v1063 = vpop.permute.xlu0 %1062
        %v1067 = vcombine.high %v1059, %v1059
        %v1068 = vcombine.high %v1060, %v1060
        %1069 = vrot.lane.b32.xlu0 %v1059, 46
        %v1070 = vpop.permute.xlu0 %1069
        %1071 = vrot.lane.b32.xlu0 %v1067, 46
        %v1072 = vpop.permute.xlu0 %1071
        %1073 = vrot.lane.b32.xlu0 %v1060, 46
        %v1074 = vpop.permute.xlu0 %1073
        %1075 = vrot.lane.b32.xlu0 %v1068, 46
        %v1076 = vpop.permute.xlu0 %1075
        %vm1077 = vcmask 375808
        %v1078 = vsel %vm1077, %v1070, %v1072
        %v1079 = vsel %vm1077, %v1072, %v1074
        %v1080 = vsel %vm1077, %v1074, %v1076
        %v1084 = vmul.f32 %v1063, %v1078
        %v1085 = vmul.f32 %v1063, %v1079
        %v1086 = vmul.f32 %v1063, %v1080
        %v1087 = vadd.f32 %v1056, %v1084
        %v1088 = vadd.f32 %v1057, %v1085
        %v1089 = vadd.f32 %v1058, %v1086
        %v1090 = vld [vmem:[%s465] sm:$0xff]
        %v1091 = vld [vmem:[%s465 + $0x8] sm:$0xff]
        %1092 = vset.pattern.permute.xlu0 23
        %1093 = vperm.xlu0 %1092, %v467
        %v1094 = vpop.permute.xlu0 %1093
        %v1098 = vcombine.high %v1090, %v1090
        %v1099 = vcombine.high %v1091, %v1091
        %1100 = vrot.lane.b32.xlu0 %v1090, 45
        %v1101 = vpop.permute.xlu0 %1100
        %1102 = vrot.lane.b32.xlu0 %v1098, 45
        %v1103 = vpop.permute.xlu0 %1102
        %1104 = vrot.lane.b32.xlu0 %v1091, 45
        %v1105 = vpop.permute.xlu0 %1104
        %1106 = vrot.lane.b32.xlu0 %v1099, 45
        %v1107 = vpop.permute.xlu0 %1106
        %vm1108 = vcmask 367616
        %v1109 = vsel %vm1108, %v1101, %v1103
        %v1110 = vsel %vm1108, %v1103, %v1105
        %v1111 = vsel %vm1108, %v1105, %v1107
        %v1115 = vmul.f32 %v1094, %v1109
        %v1116 = vmul.f32 %v1094, %v1110
        %v1117 = vmul.f32 %v1094, %v1111
        %v1118 = vadd.f32 %v1087, %v1115
        %v1119 = vadd.f32 %v1088, %v1116
        %v1120 = vadd.f32 %v1089, %v1117
        %v1121 = vld [vmem:[%s465] sm:$0xff]
        %v1122 = vld [vmem:[%s465 + $0x8] sm:$0xff]
        %1123 = vset.pattern.permute.xlu0 24
        %1124 = vperm.xlu0 %1123, %v467
        %v1125 = vpop.permute.xlu0 %1124
        %v1129 = vcombine.high %v1121, %v1121
        %v1130 = vcombine.high %v1122, %v1122
        %1131 = vrot.lane.b32.xlu0 %v1121, 44
        %v1132 = vpop.permute.xlu0 %1131
        %1133 = vrot.lane.b32.xlu0 %v1129, 44
        %v1134 = vpop.permute.xlu0 %1133
        %1135 = vrot.lane.b32.xlu0 %v1122, 44
        %v1136 = vpop.permute.xlu0 %1135
        %1137 = vrot.lane.b32.xlu0 %v1130, 44
        %v1138 = vpop.permute.xlu0 %1137
        %vm1139 = vcmask 359424
        %v1140 = vsel %vm1139, %v1132, %v1134
        %v1141 = vsel %vm1139, %v1134, %v1136
        %v1142 = vsel %vm1139, %v1136, %v1138
        %v1146 = vmul.f32 %v1125, %v1140
        %v1147 = vmul.f32 %v1125, %v1141
        %v1148 = vmul.f32 %v1125, %v1142
        %v1149 = vadd.f32 %v1118, %v1146
        %v1150 = vadd.f32 %v1119, %v1147
        %v1151 = vadd.f32 %v1120, %v1148
        %v1152 = vld [vmem:[%s3] sm:$0xf]
        %1154 = vset.pattern.permute.xlu0 0
        %1155 = vperm.xlu0 %1154, %v1152
        %v1156 = vpop.permute.xlu0 %1155
        %v1158 = vadd.f32 %v1149, %v1156
        %v1159 = vadd.f32 %v1150, %v1156
        %v1160 = vadd.f32 %v1151, %v1156
        %v1161 = vld [vmem:[%s1] sm:$0x7]
        %v1163 = vlaneseq
        %v1164 = vshrl.u32 %v1163, 7
        %v1165 = vsub.s32 0, %v1164
        %v1166 = vrot.slane %v1161, %v1165
        %v1167 = vlaneseq
        %v1168 = vshrl.u32 %v1167, 7
        %v1169 = vsub.s32 1, %v1168
        %v1170 = vrot.slane %v1161, %v1169
        %v1171 = vlaneseq
        %v1172 = vshrl.u32 %v1171, 7
        %v1173 = vsub.s32 2, %v1172
        %v1174 = vrot.slane %v1161, %v1173
        %v1178 = vmul.f32 %v1158, %v1166
        %v1179 = vmul.f32 %v1159, %v1170
        %v1180 = vmul.f32 %v1160, %v1174
        %vm1181 = vcmask 1043456
        %v1182 = vsel %vm1181, %v1178, 0.0
        %v1183 = vsel %vm1181, %v1179, 0.0
        %v1184 = vadd.f32 %v1182, %v1183
        %vm1185 = vcmask 519168
        %v1186 = vsel %vm1185, %v1180, 0.0
        %v1187 = vadd.f32 %v1184, %v1186
        %1188 = vadd.xlane.f32.xlu0 %v1187
        %v1189 = vpop.xlane.xlu0 %1188
        %v1190 = vmul.f32 %v1189, 0.00390625
        %v1191 = vpack.c.bf16 %v1190, %v1190
        %v1192 = vld [vmem:[%s4] sm:$0x3]
        %v1193 = vld [vmem:[%s5] sm:$0xf]
        %vm1194 = vcmask 31744
        %v1196 = vsel %vm1194, %v1192, 0
        %vm1198 = vcmask 1041408
        %v1200 = vsel %vm1198, %v1191, 0
        %1202 = vmatprep.subr.bf16.mxu0 0
        %1203 = vmatpush1.bf16.msra.mxu0 0
        %1204 = vmatprep.subr.bf16.mxu0 0
        %1205 = vmatpush1.bf16.msra.mxu0 0
        %1206 = vmatprep.subr.bf16.mxu0 0
        %1207 = vmatpush1.bf16.msra.mxu0 0
        %1208 = vmatprep.subr.bf16.mxu0 0
        %1209 = vmatpush1.bf16.msra.mxu0 0
        %1210 = vmatprep.subr.bf16.mxu0 0
        %1211 = vmatpush1.bf16.msra.mxu0 0
        %1212 = vmatprep.subr.bf16.mxu0 0
        %1213 = vmatpush1.bf16.msra.mxu0 0
        %1214 = vmatprep.subr.bf16.mxu0 0
        %1215 = vmatpush1.bf16.msra.mxu0 0
        %1216 = vmatprep.subr.bf16.mxu0 0
        %1217 = vmatpush1.bf16.msra.mxu0 %v1200
        %1218 = vmatprep.subr.bf16.mxu0 0
        %1219 = vmatpush2.bf16.msra.mxu0 0
        %1220 = vmatprep.subr.bf16.mxu0 0
        %1221 = vmatpush2.bf16.msra.mxu0 0
        %1222 = vmatprep.subr.bf16.mxu0 0
        %1223 = vmatpush2.bf16.msra.mxu0 0
        %1224 = vmatprep.subr.bf16.mxu0 0
        %1225 = vmatpush2.bf16.msra.mxu0 0
        %1226 = vmatprep.subr.bf16.mxu0 0
        %1227 = vmatpush2.bf16.msra.mxu0 0
        %1228 = vmatprep.subr.bf16.mxu0 0
        %1229 = vmatpush2.bf16.msra.mxu0 0
        %1230 = vmatprep.subr.bf16.mxu0 0
        %1231 = vmatpush2.bf16.msra.mxu0 0
        %1232 = vmatprep.subr.bf16.mxu0 0
        %1233 = vmatpush2.bf16.msra.mxu0 0
        %1234 = vmatprep.mubr.bf16.mxu0 0
        %1235 = vmatmul.mubr.bf16.gmra.mxu0 %v1196
        %v1236 = vpop.f32.mrf.mxu0
        %v1237 = vadd.f32 %v1193, %v1236
        %v1238 = vpop.f32.mrf.mxu0
        %v1239 = vpop.f32.mrf.mxu0
        %v1240 = vpop.f32.mrf.mxu0
        %1241 = vdwg.mxu0
        %v1242 = vmax.f32 %v1237, 0.0
        %v1243 = vpack.c.bf16 %v1242, %v1242
        %v1244 = vld [vmem:[%s6] sm:$0x3]
        %v1245 = vld [vmem:[%s7] sm:$0xf]
        %v1247 = vsel %vm1194, %v1244, 0
        %v1250 = vsel %vm1198, %v1243, 0
        %1252 = vmatprep.subr.bf16.mxu0 0
        %1253 = vmatpush1.bf16.msra.mxu0 0
        %1254 = vmatprep.subr.bf16.mxu0 0
        %1255 = vmatpush1.bf16.msra.mxu0 0
        %1256 = vmatprep.subr.bf16.mxu0 0
        %1257 = vmatpush1.bf16.msra.mxu0 0
        %1258 = vmatprep.subr.bf16.mxu0 0
        %1259 = vmatpush1.bf16.msra.mxu0 0
        %1260 = vmatprep.subr.bf16.mxu0 0
        %1261 = vmatpush1.bf16.msra.mxu0 0
        %1262 = vmatprep.subr.bf16.mxu0 0
        %1263 = vmatpush1.bf16.msra.mxu0 0
        %1264 = vmatprep.subr.bf16.mxu0 0
        %1265 = vmatpush1.bf16.msra.mxu0 0
        %1266 = vmatprep.subr.bf16.mxu0 0
        %1267 = vmatpush1.bf16.msra.mxu0 %v1250
        %1268 = vmatprep.subr.bf16.mxu0 0
        %1269 = vmatpush2.bf16.msra.mxu0 0
        %1270 = vmatprep.subr.bf16.mxu0 0
        %1271 = vmatpush2.bf16.msra.mxu0 0
        %1272 = vmatprep.subr.bf16.mxu0 0
        %1273 = vmatpush2.bf16.msra.mxu0 0
        %1274 = vmatprep.subr.bf16.mxu0 0
        %1275 = vmatpush2.bf16.msra.mxu0 0
        %1276 = vmatprep.subr.bf16.mxu0 0
        %1277 = vmatpush2.bf16.msra.mxu0 0
        %1278 = vmatprep.subr.bf16.mxu0 0
        %1279 = vmatpush2.bf16.msra.mxu0 0
        %1280 = vmatprep.subr.bf16.mxu0 0
        %1281 = vmatpush2.bf16.msra.mxu0 0
        %1282 = vmatprep.subr.bf16.mxu0 0
        %1283 = vmatpush2.bf16.msra.mxu0 0
        %1284 = vmatprep.mubr.bf16.mxu0 0
        %1285 = vmatmul.mubr.bf16.gmra.mxu0 %v1247
        %v1286 = vpop.f32.mrf.mxu0
        %v1287 = vadd.f32 %v1245, %v1286
        %v1288 = vpop.f32.mrf.mxu0
        %v1289 = vpop.f32.mrf.mxu0
        %v1290 = vpop.f32.mrf.mxu0
        %1291 = vdwg.mxu0
        %v1292 = vsub.f32 0.0, %v1287
        %v1293 = vmul.f32 %v1292, 1.442695
        %v1294 = vpow.pop %v1293
        %v1295 = vadd.f32 %v1294, 1.0
        %v1296 = vrcp.pop %v1295
        %1298 = vset.pattern.permute.xlu0 0
        %1299 = vperm.xlu0 %1298, %v1296
        %v1300 = vpop.permute.xlu0 %1299
        %v1302 = vmul.f32 %v1178, %v1300
        %v1303 = vmul.f32 %v1179, %v1300
        %v1304 = vmul.f32 %v1180, %v1300
        %v1305 = vld [vmem:[%s8] sm:$0xf]
        %v1306 = vld [vmem:[%s8 + $0x4] sm:$0xf]
        %v1307 = vpack.c.bf16 %v1302, %v1302
        %v1308 = vpack.c.bf16 %v1303, %v1303
        %v1309 = vpack.c.bf16 %v1304, %v1304
        %v1310 = vld [vmem:[%s9] sm:$0xff]
        %v1311 = vld [vmem:[%s9 + $0x8] sm:$0xff]
        %1313 = vset.pattern.permute.xlu0 0
        %1314 = vperm.xlu0 %1313, %v1310
        %v1315 = vpop.permute.xlu0 %1314
        %1318 = vset.pattern.permute.xlu0 0
        %1319 = vperm.xlu0 %1318, %v1311
        %v1320 = vpop.permute.xlu0 %1319
        %v1324 = vunpack.c.l.b16 %v1305
        %v1325 = vunpack.c.l.b16 %v1306
        %v1326 = vpack.c.b16 %v1325, %v1324
        %v1328 = vsel %vm1194, %v1326, 0
        %v1331 = vsel %vm1198, %v1307, 0
        %v1334 = vsel %vm1198, %v1308, 0
        %v1337 = vsel %vm1198, %v1309, 0
        %1339 = vmatprep.subr.bf16.mxu0 0
        %1340 = vmatpush1.bf16.msra.mxu0 0
        %1341 = vmatprep.subr.bf16.mxu0 0
        %1342 = vmatpush1.bf16.msra.mxu0 0
        %1343 = vmatprep.subr.bf16.mxu0 0
        %1344 = vmatpush1.bf16.msra.mxu0 0
        %1345 = vmatprep.subr.bf16.mxu0 0
        %1346 = vmatpush1.bf16.msra.mxu0 0
        %1347 = vmatprep.subr.bf16.mxu0 0
        %1348 = vmatpush1.bf16.msra.mxu0 0
        %1349 = vmatprep.subr.bf16.mxu0 0
        %1350 = vmatpush1.bf16.msra.mxu0 0
        %1351 = vmatprep.subr.bf16.mxu0 0
        %1352 = vmatpush1.bf16.msra.mxu0 0
        %1353 = vmatprep.subr.bf16.mxu0 %v1334
        %1354 = vmatpush1.bf16.msra.mxu0 %v1331
        %1355 = vmatprep.subr.bf16.mxu0 0
        %1356 = vmatpush2.bf16.msra.mxu0 0
        %1357 = vmatprep.subr.bf16.mxu0 0
        %1358 = vmatpush2.bf16.msra.mxu0 0
        %1359 = vmatprep.subr.bf16.mxu0 0
        %1360 = vmatpush2.bf16.msra.mxu0 0
        %1361 = vmatprep.subr.bf16.mxu0 0
        %1362 = vmatpush2.bf16.msra.mxu0 0
        %1363 = vmatprep.subr.bf16.mxu0 0
        %1364 = vmatpush2.bf16.msra.mxu0 0
        %1365 = vmatprep.subr.bf16.mxu0 0
        %1366 = vmatpush2.bf16.msra.mxu0 0
        %1367 = vmatprep.subr.bf16.mxu0 0
        %1368 = vmatpush2.bf16.msra.mxu0 0
        %1369 = vmatprep.subr.bf16.mxu0 0
        %1370 = vmatpush2.bf16.msra.mxu0 0
        %1371 = vmatprep.mubr.bf16.mxu0 0
        %1372 = vmatmul.mubr.bf16.gmra.mxu0 %v1328
        %v1373 = vpop.f32.mrf.mxu0
        %v1374 = vadd.f32 %v1315, %v1373
        %v1375 = vpop.f32.mrf.mxu0
        %v1376 = vadd.f32 %v1315, %v1375
        %v1377 = vpop.f32.mrf.mxu0
        %v1378 = vadd.f32 %v1320, %v1377
        %v1379 = vpop.f32.mrf.mxu0
        %v1380 = vadd.f32 %v1320, %v1379
        %1381 = vdwg.mxu0
        %1382 = vmatprep.subr.bf16.mxu0 0
        %1383 = vmatpush1.bf16.msra.mxu0 0
        %1384 = vmatprep.subr.bf16.mxu0 0
        %1385 = vmatpush1.bf16.msra.mxu0 0
        %1386 = vmatprep.subr.bf16.mxu0 0
        %1387 = vmatpush1.bf16.msra.mxu0 0
        %1388 = vmatprep.subr.bf16.mxu0 0
        %1389 = vmatpush1.bf16.msra.mxu0 0
        %1390 = vmatprep.subr.bf16.mxu0 0
        %1391 = vmatpush1.bf16.msra.mxu0 0
        %1392 = vmatprep.subr.bf16.mxu0 0
        %1393 = vmatpush1.bf16.msra.mxu0 0
        %1394 = vmatprep.subr.bf16.mxu0 0
        %1395 = vmatpush1.bf16.msra.mxu0 0
        %1396 = vmatprep.subr.bf16.mxu0 0
        %1397 = vmatpush1.bf16.msra.mxu0 %v1337
        %1398 = vmatprep.subr.bf16.mxu0 0
        %1399 = vmatpush2.bf16.msra.mxu0 0
        %1400 = vmatprep.subr.bf16.mxu0 0
        %1401 = vmatpush2.bf16.msra.mxu0 0
        %1402 = vmatprep.subr.bf16.mxu0 0
        %1403 = vmatpush2.bf16.msra.mxu0 0
        %1404 = vmatprep.subr.bf16.mxu0 0
        %1405 = vmatpush2.bf16.msra.mxu0 0
        %1406 = vmatprep.subr.bf16.mxu0 0
        %1407 = vmatpush2.bf16.msra.mxu0 0
        %1408 = vmatprep.subr.bf16.mxu0 0
        %1409 = vmatpush2.bf16.msra.mxu0 0
        %1410 = vmatprep.subr.bf16.mxu0 0
        %1411 = vmatpush2.bf16.msra.mxu0 0
        %1412 = vmatprep.subr.bf16.mxu0 0
        %1413 = vmatpush2.bf16.msra.mxu0 0
        %1414 = vmatprep.mubr.bf16.mxu0 0
        %1415 = vmatmul.mubr.bf16.gmra.mxu0 %v1328
        %v1416 = vpop.f32.mrf.mxu0
        %v1417 = vadd.f32 %v1315, %v1416
        %v1418 = vpop.f32.mrf.mxu0
        %v1419 = vpop.f32.mrf.mxu0
        %v1420 = vadd.f32 %v1320, %v1419
        %v1421 = vpop.f32.mrf.mxu0
        %1422 = vdwg.mxu0
        %v1423 = vmul.f32 %v1374, 0.5
        %v1424 = vmul.f32 %v1376, 0.5
        %v1425 = vmul.f32 %v1417, 0.5
        %v1426 = vmul.f32 %v1378, 0.5
        %v1427 = vmul.f32 %v1380, 0.5
        %v1428 = vmul.f32 %v1420, 0.5
        %v1429 = vmul.f32 %v1374, 0.044715
        %v1430 = vmul.f32 %v1376, 0.044715
        %v1431 = vmul.f32 %v1417, 0.044715
        %v1432 = vmul.f32 %v1378, 0.044715
        %v1433 = vmul.f32 %v1380, 0.044715
        %v1434 = vmul.f32 %v1420, 0.044715
        %v1435 = vmul.f32 %v1429, %v1374
        %v1436 = vmul.f32 %v1430, %v1376
        %v1437 = vmul.f32 %v1431, %v1417
        %v1438 = vmul.f32 %v1432, %v1378
        %v1439 = vmul.f32 %v1433, %v1380
        %v1440 = vmul.f32 %v1434, %v1420
        %v1441 = vmul.f32 %v1435, %v1374
        %v1442 = vmul.f32 %v1436, %v1376
        %v1443 = vmul.f32 %v1437, %v1417
        %v1444 = vmul.f32 %v1438, %v1378
        %v1445 = vmul.f32 %v1439, %v1380
        %v1446 = vmul.f32 %v1440, %v1420
        %v1447 = vadd.f32 %v1374, %v1441
        %v1448 = vadd.f32 %v1376, %v1442
        %v1449 = vadd.f32 %v1417, %v1443
        %v1450 = vadd.f32 %v1378, %v1444
        %v1451 = vadd.f32 %v1380, %v1445
        %v1452 = vadd.f32 %v1420, %v1446
        %v1453 = vmul.f32 %v1447, 0.7978846
        %v1454 = vmul.f32 %v1448, 0.7978846
        %v1455 = vmul.f32 %v1449, 0.7978846
        %v1456 = vmul.f32 %v1450, 0.7978846
        %v1457 = vmul.f32 %v1451, 0.7978846
        %v1458 = vmul.f32 %v1452, 0.7978846
        %v1459 = vtanh.pop %v1453
        %v1460 = vtanh.pop %v1454
        %v1461 = vtanh.pop %v1455
        %v1462 = vtanh.pop %v1456
        %v1463 = vtanh.pop %v1457
        %v1464 = vtanh.pop %v1458
        %v1465 = vadd.f32 %v1459, 1.0
        %v1466 = vadd.f32 %v1460, 1.0
        %v1467 = vadd.f32 %v1461, 1.0
        %v1468 = vadd.f32 %v1462, 1.0
        %v1469 = vadd.f32 %v1463, 1.0
        %v1470 = vadd.f32 %v1464, 1.0
        %v1471 = vmul.f32 %v1423, %v1465
        %v1472 = vmul.f32 %v1424, %v1466
        %v1473 = vmul.f32 %v1425, %v1467
        %v1474 = vmul.f32 %v1426, %v1468
        %v1475 = vmul.f32 %v1427, %v1469
        %v1476 = vmul.f32 %v1428, %v1470
        %v1477 = vmul.f32 %v1471, %v1166
        %v1478 = vmul.f32 %v1472, %v1170
        %v1479 = vmul.f32 %v1473, %v1174
        %v1480 = vmul.f32 %v1474, %v1166
        %v1481 = vmul.f32 %v1475, %v1170
        %v1482 = vmul.f32 %v1476, %v1174
        %v1483 = vmul.f32 %v1477, %v1477
        %v1484 = vmul.f32 %v1478, %v1478
        %v1485 = vmul.f32 %v1479, %v1479
        %v1486 = vmul.f32 %v1480, %v1480
        %v1487 = vmul.f32 %v1481, %v1481
        %v1488 = vmul.f32 %v1482, %v1482
        %v1489 = vadd.f32 %v1483, %v1484
        %v1490 = vsel %vm985, %v1485, 0.0
        %v1491 = vadd.f32 %v1489, %v1490
        %1492 = vadd.xlane.f32.xlu0 %v1491
        %v1493 = vpop.xlane.xlu0 %1492
        %v1494 = vadd.f32 %v1486, %v1487
        %v1495 = vsel %vm985, %v1488, 0.0
        %v1496 = vadd.f32 %v1494, %v1495
        %1497 = vadd.xlane.f32.xlu0 %v1496
        %v1498 = vpop.xlane.xlu0 %1497
        %v1499 = vrsqrt.pop %v1493
        %v1500 = vmul.f32 %v1493, %v1499
        %vm1501 = vcmp.eq.f32.partialorder %v1493, inf
        %v1502 = vsel %vm1501, %v1493, %v1500
        %vm1503 = vcmp.eq.f32.partialorder %v1493, 0.0
        %v1504 = vand.u32 %v1493, 2147483648
        %v1505 = vsel %vm1503, %v1504, %v1502
        %v1506 = vrsqrt.pop %v1498
        %v1507 = vmul.f32 %v1498, %v1506
        %vm1508 = vcmp.eq.f32.partialorder %v1498, inf
        %v1509 = vsel %vm1508, %v1498, %v1507
        %vm1510 = vcmp.eq.f32.partialorder %v1498, 0.0
        %v1511 = vand.u32 %v1498, 2147483648
        %v1512 = vsel %vm1510, %v1511, %v1509
        %v1513 = vadd.f32 %v1505, %v1512
        %v1514 = vrot.slane %v1513, 4
        %v1515 = vadd.f32 %v1513, %v1514
        %v1516 = vrot.slane %v1515, 2
        %v1517 = vadd.f32 %v1515, %v1516
        %v1518 = vrot.slane %v1517, 1
        %v1519 = vadd.f32 %v1517, %v1518
        %v1520 = vrcp.pop 16.0
        %v1521 = vmul.f32 %v1519, %v1520
        %v1522 = vadd.f32 %v1521, 1e-06
        %v1523 = vrcp.pop %v1522
        %v1524 = vmul.f32 %v1505, %v1523
        %v1525 = vmul.f32 %v1512, %v1523
        %v1526 = vld [vmem:[%s10] sm:$0xff]
        %v1527 = vld [vmem:[%s10 + $0x8] sm:$0xff]
        %v1528 = vmul.f32 %v1526, %v1524
        %v1529 = vmul.f32 %v1527, %v1525
        %v1530 = vadd.f32 %v1528, 1.0
        %v1531 = vadd.f32 %v1529, 1.0
        %1533 = vset.pattern.permute.xlu0 0
        %1534 = vperm.xlu0 %1533, %v1530
        %v1535 = vpop.permute.xlu0 %1534
        %1538 = vset.pattern.permute.xlu0 0
        %1539 = vperm.xlu0 %1538, %v1531
        %v1540 = vpop.permute.xlu0 %1539
        %v1542 = vmul.f32 %v1535, %v1477
        %v1543 = vmul.f32 %v1535, %v1478
        %v1544 = vmul.f32 %v1535, %v1479
        %v1545 = vmul.f32 %v1540, %v1480
        %v1546 = vmul.f32 %v1540, %v1481
        %v1547 = vmul.f32 %v1540, %v1482
        %v1548 = vld [vmem:[%s11] sm:$0xff]
        %v1549 = vld [vmem:[%s11 + $0x8] sm:$0xff]
        %1551 = vset.pattern.permute.xlu0 0
        %1552 = vperm.xlu0 %1551, %v1548
        %v1553 = vpop.permute.xlu0 %1552
        %1556 = vset.pattern.permute.xlu0 0
        %1557 = vperm.xlu0 %1556, %v1549
        %v1558 = vpop.permute.xlu0 %1557
        %v1560 = vadd.f32 %v1542, %v1553
        %v1561 = vadd.f32 %v1543, %v1553
        %v1562 = vadd.f32 %v1544, %v1553
        %v1563 = vadd.f32 %v1545, %v1558
        %v1564 = vadd.f32 %v1546, %v1558
        %v1565 = vadd.f32 %v1547, %v1558
        %v1566 = vld [vmem:[%s12] sm:$0x3]
        %v1567 = vpack.c.bf16 %v1563, %v1560
        %v1568 = vpack.c.bf16 %v1564, %v1561
        %v1569 = vpack.c.bf16 %v1565, %v1562
        %v1570 = vld [vmem:[%s13] sm:$0xf]
        %1572 = vset.pattern.permute.xlu0 0
        %1573 = vperm.xlu0 %1572, %v1570
        %v1574 = vpop.permute.xlu0 %1573
        %vm1576 = vcmask 130048
        %v1578 = vsel %vm1576, %v1566, 0
        %1580 = vmatprep.subr.bf16.mxu0 0
        %1581 = vmatpush1.bf16.msra.mxu0 0
        %1582 = vmatprep.subr.bf16.mxu0 0
        %1583 = vmatpush1.bf16.msra.mxu0 0
        %1584 = vmatprep.subr.bf16.mxu0 0
        %1585 = vmatpush1.bf16.msra.mxu0 0
        %1586 = vmatprep.subr.bf16.mxu0 0
        %1587 = vmatpush1.bf16.msra.mxu0 0
        %1588 = vmatprep.subr.bf16.mxu0 0
        %1589 = vmatpush1.bf16.msra.mxu0 0
        %1590 = vmatprep.subr.bf16.mxu0 0
        %1591 = vmatpush1.bf16.msra.mxu0 0
        %1592 = vmatprep.subr.bf16.mxu0 0
        %1593 = vmatpush1.bf16.msra.mxu0 0
        %1594 = vmatprep.subr.bf16.mxu0 %v1568
        %1595 = vmatpush1.bf16.msra.mxu0 %v1567
        %1596 = vmatprep.subr.bf16.mxu0 0
        %1597 = vmatpush2.bf16.msra.mxu0 0
        %1598 = vmatprep.subr.bf16.mxu0 0
        %1599 = vmatpush2.bf16.msra.mxu0 0
        %1600 = vmatprep.subr.bf16.mxu0 0
        %1601 = vmatpush2.bf16.msra.mxu0 0
        %1602 = vmatprep.subr.bf16.mxu0 0
        %1603 = vmatpush2.bf16.msra.mxu0 0
        %1604 = vmatprep.subr.bf16.mxu0 0
        %1605 = vmatpush2.bf16.msra.mxu0 0
        %1606 = vmatprep.subr.bf16.mxu0 0
        %1607 = vmatpush2.bf16.msra.mxu0 0
        %1608 = vmatprep.subr.bf16.mxu0 0
        %1609 = vmatpush2.bf16.msra.mxu0 0
        %1610 = vmatprep.subr.bf16.mxu0 0
        %1611 = vmatpush2.bf16.msra.mxu0 0
        %1612 = vmatprep.mubr.bf16.mxu0 0
        %1613 = vmatmul.mubr.bf16.gmra.mxu0 %v1578
        %v1614 = vpop.f32.mrf.mxu0
        %v1615 = vadd.f32 %v1574, %v1614
        %v1616 = vpop.f32.mrf.mxu0
        %v1617 = vadd.f32 %v1574, %v1616
        %v1618 = vpop.f32.mrf.mxu0
        %v1619 = vpop.f32.mrf.mxu0
        %1620 = vdwg.mxu0
        %1621 = vmatprep.subr.bf16.mxu0 0
        %1622 = vmatpush1.bf16.msra.mxu0 0
        %1623 = vmatprep.subr.bf16.mxu0 0
        %1624 = vmatpush1.bf16.msra.mxu0 0
        %1625 = vmatprep.subr.bf16.mxu0 0
        %1626 = vmatpush1.bf16.msra.mxu0 0
        %1627 = vmatprep.subr.bf16.mxu0 0
        %1628 = vmatpush1.bf16.msra.mxu0 0
        %1629 = vmatprep.subr.bf16.mxu0 0
        %1630 = vmatpush1.bf16.msra.mxu0 0
        %1631 = vmatprep.subr.bf16.mxu0 0
        %1632 = vmatpush1.bf16.msra.mxu0 0
        %1633 = vmatprep.subr.bf16.mxu0 0
        %1634 = vmatpush1.bf16.msra.mxu0 0
        %1635 = vmatprep.subr.bf16.mxu0 0
        %1636 = vmatpush1.bf16.msra.mxu0 %v1569
        %1637 = vmatprep.subr.bf16.mxu0 0
        %1638 = vmatpush2.bf16.msra.mxu0 0
        %1639 = vmatprep.subr.bf16.mxu0 0
        %1640 = vmatpush2.bf16.msra.mxu0 0
        %1641 = vmatprep.subr.bf16.mxu0 0
        %1642 = vmatpush2.bf16.msra.mxu0 0
        %1643 = vmatprep.subr.bf16.mxu0 0
        %1644 = vmatpush2.bf16.msra.mxu0 0
        %1645 = vmatprep.subr.bf16.mxu0 0
        %1646 = vmatpush2.bf16.msra.mxu0 0
        %1647 = vmatprep.subr.bf16.mxu0 0
        %1648 = vmatpush2.bf16.msra.mxu0 0
        %1649 = vmatprep.subr.bf16.mxu0 0
        %1650 = vmatpush2.bf16.msra.mxu0 0
        %1651 = vmatprep.subr.bf16.mxu0 0
        %1652 = vmatpush2.bf16.msra.mxu0 0
        %1653 = vmatprep.mubr.bf16.mxu0 0
        %1654 = vmatmul.mubr.bf16.gmra.mxu0 %v1578
        %v1655 = vpop.f32.mrf.mxu0
        %v1656 = vadd.f32 %v1574, %v1655
        %v1657 = vpop.f32.mrf.mxu0
        %v1658 = vpop.f32.mrf.mxu0
        %v1659 = vpop.f32.mrf.mxu0
        %1660 = vdwg.mxu0
        %v1664 = vcombine.low %v1615, %v1617
        %1665 = vrot.lane.b32.xlu0 %v1664, 42
        %v1666 = vpop.permute.xlu0 %1665
        %1667 = vrot.lane.b32.xlu0 %v1656, 42
        %v1668 = vpop.permute.xlu0 %1667
        %v1669 = vrot.slane %v1666, 4
        %vm1670 = vcmask 343040
        %v1671 = vsel %vm1670, %v1669, %v1666
        %v1672 = vsel %vm1670, %v1669, %v1668
        %v1675 = vadd.f32 %v781, %v1671
        %v1676 = vadd.f32 %v782, %v1672
        %1679 = vrot.lane.b32.xlu0 %v1675, 86
        %v1680 = vpop.permute.xlu0 %1679
        %1681 = vrot.lane.b32.xlu0 %v1676, 86
        %v1682 = vpop.permute.xlu0 %1681
        %v1683 = vrot.slane %v1680, 4
        %v1684 = vrot.slane %v1682, 4
        %v1685 = vsel %vm1181, %v1683, %v1684
        %v1686 = vsel %vm796, %v1680, %v1685
        %1689 = vst [vmem:[%s460] sm:$0xff] %v1686
        %1690 = vst.msk [vmem:[%s460 + $0x8] sm:$0xf] %vm1185, %v1682
        %s1691 = sand.u32 %s335, 1
        %s1692 = scalar_lea.sflag [#allocation3], %s1691
        %s1693 = sand.u32 %s335, 1
        %s1694 = smul.addr %s1693, 12
        %s1695 = scalar_lea.vmem [#allocation2], %s1694
        // Predicated region
        $region77: #{tpu_custom_call.1} parent=75 // pred_check
          %p1696 = pneg %p345
        $region78: #{tpu_custom_call.1} parent=75 // pred_check_branch
          %1698 = sbr.rel (%p1696) target = $region80
        $region79: #{tpu_custom_call.1} parent=75 // pred_region
          %s1700 = ssub.s32 192, 192
          %1701 = vsyncadd %s1692, %s1700
          %s1702 = smul.addr %s28, 3
          %s1703 = smul.addr %s1702, 64
          %s1704 = scalar_lea.hbm %s14, %s1703
          %s1706 = sshll.u32 %s1695, 4
          %s1707 = int_to_ptr.vmem [resolvable:$true] %s1706
          %1709 = dma.vmem_to_hbm [thread:$0]  %s1707, 192, %s1704, %s1692
        $region80: #{tpu_custom_call.1} parent=75 // pred_fallthru
          _
      $region76: #{tpu_custom_call.1} parent=5 // pred_fallthru
        _
      %p1710 = scmp.le.s32.totalorder 2, %s23
      // Predicated region
      $region81: #{tpu_custom_call.1} parent=5 // pred_check
        %p1711 = pneg %p1710
      $region82: #{tpu_custom_call.1} parent=5 // pred_check_branch
        %1713 = sbr.rel (%p1711) target = $region84
      $region83: #{tpu_custom_call.1} parent=5 // pred_region
        %s1714 = ssub.s32 %s23, 2
        // Predicated region
        $region85: #{tpu_custom_call.1} parent=83 // pred_check
          %p1715 = pneg %p351
        $region86: #{tpu_custom_call.1} parent=83 // pred_check_branch
          %1717 = sbr.rel (%p1715) target = $region88
        $region87: #{tpu_custom_call.1} parent=83 // pred_region
          %s1718 = sand.u32 %s336, 1
          %s1719 = scalar_lea.sflag [#allocation3], %s1718
          %s1720 = sand.u32 %s336, 1
          %s1721 = smul.addr %s1720, 12
          %s1722 = scalar_lea.vmem [#allocation2], %s1721
          %1723 = dma.done %s1719, 192
        $region88: #{tpu_custom_call.1} parent=83 // pred_fallthru
          _
      $region84: #{tpu_custom_call.1} parent=5 // pred_fallthru
        _
    $region6: #{tpu_custom_call.1} parent=1 // loop_footer
      %s27 = sadd.s32 1, %s23
    $region7: #{tpu_custom_call.1} parent=1 // loop_footer_branch
      %22 = sbr.rel target = $region3
    $region8: #{tpu_custom_call.1} parent=1 // loop_exit
      _
    %1724 = vsyncpa [#allocation3], 1
    %s1725 = scalar_lea.sflag [#allocation3], 1
    %1726 = vsyncpa %s1725, 1

</llo_original>
